<compile_context>
chip_gen: v5e
topology: v5e:2x2
jax: 0.10.0
libtpu: 0.0.40
codegen_flags: <defaults>
</compile_context>

<pallas_src>
import jax
import jax.numpy as jnp
from jax.experimental import pallas as pl
from jax.experimental.pallas import tpu as pltpu


def _round_up(a, b):
    return ((a + b - 1) // b) * b


# ----------------------------- Pallas kernel -------------------------------- #
def _make_kernel(tile_n, d_attn, n_true, n_classes, need_mask):
    def kernel(x_ref, w1_ref, b1_ref, wab_ref, bab_ref, wc_ref, bc_ref,
               wcls_ref, bcls_ref,
               attn_ref, logits_ref, yprob_ref, m_out_ref,
               m_sc, l_sc, macc_sc):
        i = pl.program_id(0)

        @pl.when(i == 0)
        def _init():
            m_sc[...] = jnp.full(m_sc.shape, -1e30, m_sc.dtype)
            l_sc[...] = jnp.zeros(l_sc.shape, l_sc.dtype)
            macc_sc[...] = jnp.zeros(macc_sc.shape, macc_sc.dtype)

        # attention_net[0..2]: Linear(input_dim, 512) + ReLU (+ Dropout == id, eval)
        x_b = x_ref[...].astype(jnp.bfloat16)
        h = jnp.dot(x_b, w1_ref[...],
                    preferred_element_type=jnp.float32) + b1_ref[...]
        h = jnp.maximum(h, 0.0)                                    # (TN, L) f32

        if need_mask:
            # Only the last grid step can contain rows past N.  Gate the (large)
            # row-zeroing of h behind a runtime conditional so every other tile
            # skips it; zeroing h keeps garbage/NaN rows out of the pv matmul.
            def _zero_pad_rows(hv):
                row = jax.lax.broadcasted_iota(jnp.int32, (tile_n, 1), 0) + i * tile_n
                return jnp.where(row < n_true, hv, 0.0)

            h = jax.lax.cond((i + 1) * tile_n > n_true,
                             _zero_pad_rows, lambda hv: hv, h)

        h_b = h.astype(jnp.bfloat16)

        # AttnNetGated with fused [Wa | Wb] projection (one MXU pass, one bias add).
        ab = jnp.dot(h_b, wab_ref[...],
                     preferred_element_type=jnp.float32) + bab_ref[...]   # (TN, 2D)
        a = jnp.tanh(ab[:, :d_attn])
        g = jax.nn.sigmoid(ab[:, d_attn:])
        gated = (a * g).astype(jnp.bfloat16)                       # (TN, D)

        # Attention logits directly in the lane-dense transposed layout:
        #   s_T = Wc^T . gated^T  ->  (C_pad, TN)
        s_t = jax.lax.dot_general(wc_ref[...], gated,
                                  (((0,), (1,)), ((), ())),
                                  preferred_element_type=jnp.float32) + bc_ref[...]

        # Raw (pre-softmax) attention; lane-dense store, wrapper slices [:C, :N].
        attn_ref[...] = s_t

        if need_mask:
            col = jax.lax.broadcasted_iota(jnp.int32, s_t.shape, 1) + i * tile_n
            s_t = jnp.where(col < n_true, s_t, -1e30)

        # --- online softmax over the instance (lane) axis -------------------- #
        t_max = jnp.max(s_t, axis=1, keepdims=True)                # (C_pad, 1)
        m_new = jnp.maximum(m_sc[...], t_max)
        alpha = jnp.exp(m_sc[...] - m_new)                         # (C_pad, 1)
        p = jnp.exp(s_t - m_new)                                   # (C_pad, TN)
        l_sc[...] = alpha * l_sc[...] + jnp.sum(p, axis=1, keepdims=True)

        # Bag pooling accumulator kept as M itself: (C_pad, L).
        pv = jnp.dot(p.astype(jnp.bfloat16), h_b,
                     preferred_element_type=jnp.float32)           # (C_pad, L)
        macc_sc[...] = alpha * macc_sc[...] + pv
        m_sc[...] = m_new

        # --- finalize on the last tile --------------------------------------- #
        @pl.when(i == pl.num_programs(0) - 1)
        def _finalize():
            # Exact division for the one-time softmax normalization.
            m_lc = macc_sc[...] / l_sc[...]                        # (C_pad, L) == M
            # TODO(synk): self.modify(x, M) uses undefined submodules; identity here.
            m_out_ref[...] = m_lc

            # classifiers: logits[c] = M[c] . Wcls + bcls   (Wcls stored as (1, L))
            lg = jnp.sum(m_lc * wcls_ref[...], axis=1, keepdims=True) + bcls_ref[...]
            logits_ref[...] = lg                                   # (C_pad, 1)

            cls_row = jax.lax.broadcasted_iota(jnp.int32, lg.shape, 0)
            lg_m = jnp.where(cls_row < n_classes, lg, -1e30)       # mask padded classes
            lmax = jnp.max(lg_m, axis=0, keepdims=True)
            le = jnp.exp(lg_m - lmax)
            yprob_ref[...] = le / jnp.sum(le, axis=0, keepdims=True)

    return kernel


# ------------------------------ JAX wrapper --------------------------------- #
def clamsb_forward(x, params, attention_only=False, return_features=False,
                   tile_n=1024):
    """x: (N, input_dim) float32.  Returns (logits, Y_prob, Y_hat, attn_raw, results_dict)."""
    N, input_dim = x.shape
    L = params["w1"].shape[1]          # 512
    D = params["wa"].shape[1]          # 256
    C = params["wc"].shape[1]          # n_classes
    C_pad = _round_up(max(C, 1), 8)    # sublane-pad the class axis

    if N <= tile_n:
        tile = _round_up(N, 8)         # single tile; full-extent last dims are legal
    else:
        tile = _round_up(tile_n, 128)  # lane-dense attn store needs tile % 128 == 0
    n_tiles = -(-N // tile)
    n_cols = n_tiles * tile
    need_mask = (n_cols != N)

    # Weights: tiny one-time casts (no copy of x anywhere).
    w1 = params["w1"].astype(jnp.bfloat16)                                     # (K, L)
    b1 = params["b1"].astype(jnp.float32).reshape(1, L)
    wab = jnp.concatenate([params["wa"], params["wb"]], axis=1).astype(jnp.bfloat16)
    bab = jnp.concatenate([params["ba"], params["bb"]], axis=1).astype(jnp.float32).reshape(1, 2 * D)
    wc = jnp.zeros((D, C_pad), jnp.bfloat16).at[:, :C].set(params["wc"].astype(jnp.bfloat16))
    bc = jnp.zeros((C_pad, 1), jnp.float32).at[:C, 0].set(
        params["bc"].reshape(-1).astype(jnp.float32))
    wcls = params["wcls"].astype(jnp.float32).reshape(1, L)                    # transposed head
    bcls = params["bcls"].astype(jnp.float32).reshape(1, 1)

    # VMEM budget: computed from actual need (double-buffered blocks + temporaries).
    vmem_est = (
        2 * tile * input_dim * 4                                   # x blocks (f32)
        + 2 * 2 * (input_dim * L + L * 2 * D + D * C_pad)          # bf16 weights
        + 2 * 4 * (L + 2 * D + C_pad + L + 1)                      # biases / wcls
        + 2 * 4 * (C_pad * tile)                                   # attn out block
        + 2 * 4 * (C_pad * (L + 2))                                # logits/yprob/M out
        + 4 * (C_pad * (L + 2))                                    # scratch
        + tile * (6 * L + 6 * D + 6 * C_pad)                       # live f32/bf16 temps
    )
    vmem_limit = int(min(max(2 * vmem_est, 32 << 20), 100 << 20))

    kernel = _make_kernel(tile, D, N, C, need_mask)

    attn_pad, lg_col, yp_col, m_mat = pl.pallas_call(
        kernel,
        grid=(n_tiles,),
        in_specs=[
            pl.BlockSpec((tile, input_dim), lambda i: (i, 0)),     # x (streamed, f32)
            pl.BlockSpec((input_dim, L), lambda i: (0, 0)),        # w1 (resident)
            pl.BlockSpec((1, L), lambda i: (0, 0)),                # b1
            pl.BlockSpec((L, 2 * D), lambda i: (0, 0)),            # fused [Wa|Wb]
            pl.BlockSpec((1, 2 * D), lambda i: (0, 0)),            # fused [ba|bb]
            pl.BlockSpec((D, C_pad), lambda i: (0, 0)),            # Wc (class-padded)
            pl.BlockSpec((C_pad, 1), lambda i: (0, 0)),            # bc
            pl.BlockSpec((1, L), lambda i: (0, 0)),                # Wcls^T
            pl.BlockSpec((1, 1), lambda i: (0, 0)),                # bcls
        ],
        out_specs=(
            pl.BlockSpec((C_pad, tile), lambda i: (0, i)),         # raw attn (lane-dense)
            pl.BlockSpec((C_pad, 1), lambda i: (0, 0)),            # logits column
            pl.BlockSpec((C_pad, 1), lambda i: (0, 0)),            # Y_prob column
            pl.BlockSpec((C_pad, L), lambda i: (0, 0)),            # M
        ),
        out_shape=(
            jax.ShapeDtypeStruct((C_pad, n_cols), jnp.float32),
            jax.ShapeDtypeStruct((C_pad, 1), jnp.float32),
            jax.ShapeDtypeStruct((C_pad, 1), jnp.float32),
            jax.ShapeDtypeStruct((C_pad, L), jnp.float32),
        ),
        scratch_shapes=[
            pltpu.VMEM((C_pad, 1), jnp.float32),                   # running max
            pltpu.VMEM((C_pad, 1), jnp.float32),                   # running denom
            pltpu.VMEM((C_pad, L), jnp.float32),                   # M accumulator
        ],
        compiler_params=pltpu.CompilerParams(
            dimension_semantics=("arbitrary",),
            vmem_limit_bytes=vmem_limit,
        ),
    )(x, w1, b1, wab, bab, wc, bc, wcls, bcls)

    # Module-layout outputs directly (no transposes).
    attn_raw = attn_pad[:C, :N]                                    # (C, N)
    if attention_only:
        return attn_raw

    logits = lg_col[:C, 0].reshape(1, C)
    y_prob = yp_col[:C, 0].reshape(1, C)
    y_hat = jnp.argmax(logits, axis=1).reshape(-1)
    results_dict = {}
    if return_features:
        results_dict["features"] = m_mat[:C, :]                    # M, (C, 512)
    return logits, y_prob, y_hat, attn_raw, results_dict


# --------------------------- parameter construction -------------------------- #
def make_params(key, input_dim, L=512, D=256, n_classes=2):
    """Deterministic synthetic parameters. Weights stored as (in, out)."""
    ks = jax.random.split(key, 10)

    def lin(kw, kb, fin, fout, scale):
        w = jax.random.normal(kw, (fin, fout), jnp.float32) * scale
        b = jax.random.normal(kb, (1, fout), jnp.float32) * 0.01
        return w, b

    w1, b1 = lin(ks[0], ks[1], input_dim, L, 1.0 / jnp.sqrt(input_dim))
    wa, ba = lin(ks[2], ks[3], L, D, 1.0 / jnp.sqrt(L))
    wb, bb = lin(ks[4], ks[5], L, D, 1.0 / jnp.sqrt(L))
    wc, bc = lin(ks[6], ks[7], D, n_classes, 1.0 / jnp.sqrt(D))
    wcls, bcls = lin(ks[8], ks[9], L, 1, 1.0 / jnp.sqrt(L))
    return dict(w1=w1, b1=b1, wa=wa, ba=ba, wb=wb, bb=bb,
                wc=wc, bc=bc, wcls=wcls, bcls=bcls)


# ---------------------------------- main ------------------------------------ #
if __name__ == "__main__":
    key = jax.random.PRNGKey(0)
    k_x, k_p = jax.random.split(key)

    # cfgs: size_arg='small' -> [1024, 512, 256]; gate=True; num_classes=2; input_dim=64
    N, input_dim, n_classes = 8, 64, 2
    x = jax.random.normal(k_x, (N, input_dim), jnp.float32)
    params = make_params(k_p, input_dim, L=512, D=256, n_classes=n_classes)

    logits, y_prob, y_hat, attn_raw, results = clamsb_forward(
        x, params, return_features=True)
    jax.block_until_ready((logits, y_prob, y_hat, attn_raw))

    # Pure-JAX f32 reference (same math as the PyTorch module in eval mode).
    h = jnp.maximum(x @ params["w1"] + params["b1"], 0.0)
    a = jnp.tanh(h @ params["wa"] + params["ba"])
    g = jax.nn.sigmoid(h @ params["wb"] + params["bb"])
    attn_ref = ((a * g) @ params["wc"] + params["bc"]).T           # (C, N)
    attn_sm = jax.nn.softmax(attn_ref, axis=1)
    m_ref = attn_sm @ h                                            # (C, 512)
    logits_ref = (m_ref @ params["wcls"] + params["bcls"]).T       # (1, C)
    yprob_ref = jax.nn.softmax(logits_ref, axis=1)

    assert logits.shape == (1, n_classes)
    assert y_prob.shape == (1, n_classes)
    assert y_hat.shape == (1,)
    assert attn_raw.shape == (n_classes, N)
    assert results["features"].shape == (n_classes, 512)
    assert bool(jnp.all(jnp.isfinite(logits))) and bool(jnp.all(jnp.isfinite(y_prob)))
    # bf16 MXU tolerance vs. f32 reference.
    assert float(jnp.max(jnp.abs(attn_raw - attn_ref))) < 1e-1
    assert float(jnp.max(jnp.abs(logits - logits_ref))) < 1e-1
    assert float(jnp.max(jnp.abs(y_prob - yprob_ref))) < 1e-1
    print("KERNEL_OK")
</pallas_src>

<mosaic_0001>
module attributes {stable_mosaic.version = 11 : i64} {
  func.func @kernel(%arg0: i32, %arg1: memref<8x64xf32, #tpu.memory_space<vmem>>, %arg2: memref<64x512xbf16, #tpu.memory_space<vmem>>, %arg3: memref<1x512xf32, #tpu.memory_space<vmem>>, %arg4: memref<512x512xbf16, #tpu.memory_space<vmem>>, %arg5: memref<1x512xf32, #tpu.memory_space<vmem>>, %arg6: memref<256x8xbf16, #tpu.memory_space<vmem>>, %arg7: memref<8x1xf32, #tpu.memory_space<vmem>>, %arg8: memref<1x512xf32, #tpu.memory_space<vmem>>, %arg9: memref<1x1xf32, #tpu.memory_space<vmem>>, %arg10: memref<8x8xf32, #tpu.memory_space<vmem>>, %arg11: memref<8x1xf32, #tpu.memory_space<vmem>>, %arg12: memref<8x1xf32, #tpu.memory_space<vmem>>, %arg13: memref<8x512xf32, #tpu.memory_space<vmem>>, %arg14: memref<8x1xf32, #tpu.memory_space<vmem>>, %arg15: memref<8x1xf32, #tpu.memory_space<vmem>>, %arg16: memref<8x512xf32, #tpu.memory_space<vmem>>) attributes {dimension_semantics = [#tpu.dimension_semantics<arbitrary>], iteration_bounds = array<i64: 1>, scalar_prefetch = 0 : i64, scratch_operands = 3 : i64, tpu.core_type = #tpu.core_type<tc>, window_params = [{transform_indices = @transform_0, window_bounds = array<i64: 8, 64>}, {pipeline_mode = #tpu.pipeline_mode<synchronous>, transform_indices = @transform_1, window_bounds = array<i64: 64, 512>}, {pipeline_mode = #tpu.pipeline_mode<synchronous>, transform_indices = @transform_2, window_bounds = array<i64: 1, 512>}, {pipeline_mode = #tpu.pipeline_mode<synchronous>, transform_indices = @transform_3, window_bounds = array<i64: 512, 512>}, {pipeline_mode = #tpu.pipeline_mode<synchronous>, transform_indices = @transform_4, window_bounds = array<i64: 1, 512>}, {pipeline_mode = #tpu.pipeline_mode<synchronous>, transform_indices = @transform_5, window_bounds = array<i64: 256, 8>}, {pipeline_mode = #tpu.pipeline_mode<synchronous>, transform_indices = @transform_6, window_bounds = array<i64: 8, 1>}, {pipeline_mode = #tpu.pipeline_mode<synchronous>, transform_indices = @transform_7, window_bounds = array<i64: 1, 512>}, {pipeline_mode = #tpu.pipeline_mode<synchronous>, transform_indices = @transform_8, window_bounds = array<i64: 1, 1>}, {transform_indices = @transform_9, window_bounds = array<i64: 8, 8>}, {pipeline_mode = #tpu.pipeline_mode<synchronous>, transform_indices = @transform_10, window_bounds = array<i64: 8, 1>}, {pipeline_mode = #tpu.pipeline_mode<synchronous>, transform_indices = @transform_11, window_bounds = array<i64: 8, 1>}, {pipeline_mode = #tpu.pipeline_mode<synchronous>, transform_indices = @transform_12, window_bounds = array<i64: 8, 512>}]} {
    %c0_i32 = arith.constant 0 : i32
    %0 = arith.cmpi eq, %arg0, %c0_i32 : i32
    %1 = arith.extui %0 : i1 to i32
    %c0_i32_0 = arith.constant 0 : i32
    %2 = arith.cmpi ne, %1, %c0_i32_0 : i32
    scf.if %2 {
      %cst_39 = arith.constant -1.000000e+30 : f32
      %61 = vector.broadcast %cst_39 : f32 to vector<8x1xf32>
      %c0_40 = arith.constant 0 : index
      %c0_41 = arith.constant 0 : index
      %62 = vector.load %arg14[%c0_40, %c0_41] : memref<8x1xf32, #tpu.memory_space<vmem>>, vector<8x1xf32>
      tpu.vector_store %arg14[%c0_40, %c0_41], %61 {strides = array<i32>} : memref<8x1xf32, #tpu.memory_space<vmem>>, vector<8x1xf32>,
      %cst_42 = arith.constant 0.000000e+00 : f32
      %63 = vector.broadcast %cst_42 : f32 to vector<8x1xf32>
      %c0_43 = arith.constant 0 : index
      %c0_44 = arith.constant 0 : index
      %64 = vector.load %arg15[%c0_43, %c0_44] : memref<8x1xf32, #tpu.memory_space<vmem>>, vector<8x1xf32>
      tpu.vector_store %arg15[%c0_43, %c0_44], %63 {strides = array<i32>} : memref<8x1xf32, #tpu.memory_space<vmem>>, vector<8x1xf32>,
      %cst_45 = arith.constant 0.000000e+00 : f32
      %65 = vector.broadcast %cst_45 : f32 to vector<8x512xf32>
      %c0_46 = arith.constant 0 : index
      %c0_47 = arith.constant 0 : index
      %66 = vector.load %arg16[%c0_46, %c0_47] : memref<8x512xf32, #tpu.memory_space<vmem>>, vector<8x512xf32>
      tpu.vector_store %arg16[%c0_46, %c0_47], %65 {strides = array<i32>} : memref<8x512xf32, #tpu.memory_space<vmem>>, vector<8x512xf32>,
    } else {
    }
    %c0 = arith.constant 0 : index
    %c0_1 = arith.constant 0 : index
    %3 = vector.load %arg1[%c0, %c0_1] : memref<8x64xf32, #tpu.memory_space<vmem>>, vector<8x64xf32>
    %4 = arith.truncf %3 : vector<8x64xf32> to vector<8x64xbf16>
    %c0_2 = arith.constant 0 : index
    %c0_3 = arith.constant 0 : index
    %5 = vector.load %arg2[%c0_2, %c0_3] : memref<64x512xbf16, #tpu.memory_space<vmem>>, vector<64x512xbf16>
    %cst = arith.constant dense<0.000000e+00> : vector<8x512xf32>
    %6 = tpu.matmul %4, %5, %cst {dimension_numbers = #tpu.dot_dimension_numbers<[1], [0], [0], [1], [0, 0, 1, 1], [], []>} : vector<8x64xbf16>, vector<64x512xbf16>, vector<8x512xf32> -> vector<8x512xf32>
    %c0_4 = arith.constant 0 : index
    %c0_5 = arith.constant 0 : index
    %7 = vector.load %arg3[%c0_4, %c0_5] : memref<1x512xf32, #tpu.memory_space<vmem>>, vector<1x512xf32>
    %8 = vector.broadcast %7 : vector<1x512xf32> to vector<8x512xf32>
    %9 = arith.addf %6, %8 : vector<8x512xf32>
    %cst_6 = arith.constant 0.000000e+00 : f32
    %10 = vector.broadcast %cst_6 : f32 to vector<8x512xf32>
    %11 = arith.maximumf %9, %10 : vector<8x512xf32>
    %12 = arith.truncf %11 : vector<8x512xf32> to vector<8x512xbf16>
    %c0_7 = arith.constant 0 : index
    %c0_8 = arith.constant 0 : index
    %13 = vector.load %arg4[%c0_7, %c0_8] : memref<512x512xbf16, #tpu.memory_space<vmem>>, vector<512x512xbf16>
    %cst_9 = arith.constant dense<0.000000e+00> : vector<8x512xf32>
    %14 = tpu.matmul %12, %13, %cst_9 {dimension_numbers = #tpu.dot_dimension_numbers<[1], [0], [0], [1], [0, 0, 1, 1], [], []>} : vector<8x512xbf16>, vector<512x512xbf16>, vector<8x512xf32> -> vector<8x512xf32>
    %c0_10 = arith.constant 0 : index
    %c0_11 = arith.constant 0 : index
    %15 = vector.load %arg5[%c0_10, %c0_11] : memref<1x512xf32, #tpu.memory_space<vmem>>, vector<1x512xf32>
    %16 = vector.broadcast %15 : vector<1x512xf32> to vector<8x512xf32>
    %17 = arith.addf %14, %16 : vector<8x512xf32>
    %18 = vector.extract_strided_slice %17 {offsets = [0, 0], sizes = [8, 256], strides = [1, 1]} : vector<8x512xf32> to vector<8x256xf32>
    %19 = math.tanh %18 : vector<8x256xf32>
    %20 = vector.extract_strided_slice %17 {offsets = [0, 256], sizes = [8, 256], strides = [1, 1]} : vector<8x512xf32> to vector<8x256xf32>
    %21 = arith.negf %20 : vector<8x256xf32>
    %22 = math.exp %21 : vector<8x256xf32>
    %cst_12 = arith.constant 1.000000e+00 : f32
    %23 = vector.broadcast %cst_12 : f32 to vector<8x256xf32>
    %24 = arith.addf %23, %22 : vector<8x256xf32>
    %25 = arith.divf %23, %24 : vector<8x256xf32>
    %26 = arith.mulf %19, %25 : vector<8x256xf32>
    %27 = arith.truncf %26 : vector<8x256xf32> to vector<8x256xbf16>
    %c0_13 = arith.constant 0 : index
    %c0_14 = arith.constant 0 : index
    %28 = vector.load %arg6[%c0_13, %c0_14] : memref<256x8xbf16, #tpu.memory_space<vmem>>, vector<256x8xbf16>
    %cst_15 = arith.constant dense<0.000000e+00> : vector<8x8xf32>
    %29 = tpu.matmul %28, %27, %cst_15 {dimension_numbers = #tpu.dot_dimension_numbers<[0], [1], [1], [0], [0, 1, 1, 0], [], []>} : vector<256x8xbf16>, vector<8x256xbf16>, vector<8x8xf32> -> vector<8x8xf32>
    %c0_16 = arith.constant 0 : index
    %c0_17 = arith.constant 0 : index
    %30 = vector.load %arg7[%c0_16, %c0_17] : memref<8x1xf32, #tpu.memory_space<vmem>>, vector<8x1xf32>
    %31 = vector.broadcast %30 : vector<8x1xf32> to vector<8x8xf32>
    %32 = arith.addf %29, %31 : vector<8x8xf32>
    %c0_18 = arith.constant 0 : index
    %c0_19 = arith.constant 0 : index
    %33 = vector.load %arg10[%c0_18, %c0_19] : memref<8x8xf32, #tpu.memory_space<vmem>>, vector<8x8xf32>
    tpu.vector_store %arg10[%c0_18, %c0_19], %32 {strides = array<i32>} : memref<8x8xf32, #tpu.memory_space<vmem>>, vector<8x8xf32>,
    %cst_20 = arith.constant dense<0xFF800000> : vector<8xf32>
    %34 = vector.multi_reduction <maximumf>, %32, %cst_20 [1] : vector<8x8xf32> to vector<8xf32>
    %35 = vector.shape_cast %34 : vector<8xf32> to vector<8x1xf32>
    %c0_21 = arith.constant 0 : index
    %c0_22 = arith.constant 0 : index
    %36 = vector.load %arg14[%c0_21, %c0_22] : memref<8x1xf32, #tpu.memory_space<vmem>>, vector<8x1xf32>
    %37 = arith.maximumf %36, %35 : vector<8x1xf32>
    %c0_23 = arith.constant 0 : index
    %c0_24 = arith.constant 0 : index
    %38 = vector.load %arg14[%c0_23, %c0_24] : memref<8x1xf32, #tpu.memory_space<vmem>>, vector<8x1xf32>
    %39 = arith.subf %38, %37 : vector<8x1xf32>
    %40 = math.exp %39 : vector<8x1xf32>
    %41 = vector.broadcast %37 : vector<8x1xf32> to vector<8x8xf32>
    %42 = arith.subf %32, %41 : vector<8x8xf32>
    %43 = math.exp %42 : vector<8x8xf32>
    %c0_25 = arith.constant 0 : index
    %c0_26 = arith.constant 0 : index
    %44 = vector.load %arg15[%c0_25, %c0_26] : memref<8x1xf32, #tpu.memory_space<vmem>>, vector<8x1xf32>
    %45 = arith.mulf %40, %44 : vector<8x1xf32>
    %cst_27 = arith.constant dense<0.000000e+00> : vector<8xf32>
    %46 = vector.multi_reduction <add>, %43, %cst_27 [1] : vector<8x8xf32> to vector<8xf32>
    %47 = vector.shape_cast %46 : vector<8xf32> to vector<8x1xf32>
    %48 = arith.addf %45, %47 : vector<8x1xf32>
    %c0_28 = arith.constant 0 : index
    %c0_29 = arith.constant 0 : index
    %49 = vector.load %arg15[%c0_28, %c0_29] : memref<8x1xf32, #tpu.memory_space<vmem>>, vector<8x1xf32>
    tpu.vector_store %arg15[%c0_28, %c0_29], %48 {strides = array<i32>} : memref<8x1xf32, #tpu.memory_space<vmem>>, vector<8x1xf32>,
    %50 = arith.truncf %43 : vector<8x8xf32> to vector<8x8xbf16>
    %cst_30 = arith.constant dense<0.000000e+00> : vector<8x512xf32>
    %51 = tpu.matmul %50, %12, %cst_30 {dimension_numbers = #tpu.dot_dimension_numbers<[1], [0], [0], [1], [0, 0, 1, 1], [], []>} : vector<8x8xbf16>, vector<8x512xbf16>, vector<8x512xf32> -> vector<8x512xf32>
    %c0_31 = arith.constant 0 : index
    %c0_32 = arith.constant 0 : index
    %52 = vector.load %arg16[%c0_31, %c0_32] : memref<8x512xf32, #tpu.memory_space<vmem>>, vector<8x512xf32>
    %53 = vector.broadcast %40 : vector<8x1xf32> to vector<8x512xf32>
    %54 = arith.mulf %53, %52 : vector<8x512xf32>
    %55 = arith.addf %54, %51 : vector<8x512xf32>
    %c0_33 = arith.constant 0 : index
    %c0_34 = arith.constant 0 : index
    %56 = vector.load %arg16[%c0_33, %c0_34] : memref<8x512xf32, #tpu.memory_space<vmem>>, vector<8x512xf32>
    tpu.vector_store %arg16[%c0_33, %c0_34], %55 {strides = array<i32>} : memref<8x512xf32, #tpu.memory_space<vmem>>, vector<8x512xf32>,
    %c0_35 = arith.constant 0 : index
    %c0_36 = arith.constant 0 : index
    %57 = vector.load %arg14[%c0_35, %c0_36] : memref<8x1xf32, #tpu.memory_space<vmem>>, vector<8x1xf32>
    tpu.vector_store %arg14[%c0_35, %c0_36], %37 {strides = array<i32>} : memref<8x1xf32, #tpu.memory_space<vmem>>, vector<8x1xf32>,
    %c0_i32_37 = arith.constant 0 : i32
    %58 = arith.cmpi eq, %arg0, %c0_i32_37 : i32
    %59 = arith.extui %58 : i1 to i32
    %c0_i32_38 = arith.constant 0 : i32
    %60 = arith.cmpi ne, %59, %c0_i32_38 : i32
    scf.if %60 {
      %c0_39 = arith.constant 0 : index
      %c0_40 = arith.constant 0 : index
      %61 = vector.load %arg16[%c0_39, %c0_40] : memref<8x512xf32, #tpu.memory_space<vmem>>, vector<8x512xf32>
      %c0_41 = arith.constant 0 : index
      %c0_42 = arith.constant 0 : index
      %62 = vector.load %arg15[%c0_41, %c0_42] : memref<8x1xf32, #tpu.memory_space<vmem>>, vector<8x1xf32>
      %63 = vector.broadcast %62 : vector<8x1xf32> to vector<8x512xf32>
      %64 = arith.divf %61, %63 : vector<8x512xf32>
      %c0_43 = arith.constant 0 : index
      %c0_44 = arith.constant 0 : index
      %65 = vector.load %arg13[%c0_43, %c0_44] : memref<8x512xf32, #tpu.memory_space<vmem>>, vector<8x512xf32>
      tpu.vector_store %arg13[%c0_43, %c0_44], %64 {strides = array<i32>} : memref<8x512xf32, #tpu.memory_space<vmem>>, vector<8x512xf32>,
      %c0_45 = arith.constant 0 : index
      %c0_46 = arith.constant 0 : index
      %66 = vector.load %arg8[%c0_45, %c0_46] : memref<1x512xf32, #tpu.memory_space<vmem>>, vector<1x512xf32>
      %67 = vector.broadcast %66 : vector<1x512xf32> to vector<8x512xf32>
      %68 = arith.mulf %64, %67 : vector<8x512xf32>
      %cst_47 = arith.constant dense<0.000000e+00> : vector<8xf32>
      %69 = vector.multi_reduction <add>, %68, %cst_47 [1] : vector<8x512xf32> to vector<8xf32>
      %70 = vector.shape_cast %69 : vector<8xf32> to vector<8x1xf32>
      %c0_48 = arith.constant 0 : index
      %c0_49 = arith.constant 0 : index
      %71 = vector.load %arg9[%c0_48, %c0_49] : memref<1x1xf32, #tpu.memory_space<vmem>>, vector<1x1xf32>
      %72 = vector.broadcast %71 : vector<1x1xf32> to vector<8x1xf32>
      %73 = arith.addf %70, %72 : vector<8x1xf32>
      %c0_50 = arith.constant 0 : index
      %c0_51 = arith.constant 0 : index
      %74 = vector.load %arg11[%c0_50, %c0_51] : memref<8x1xf32, #tpu.memory_space<vmem>>, vector<8x1xf32>
      tpu.vector_store %arg11[%c0_50, %c0_51], %73 {strides = array<i32>} : memref<8x1xf32, #tpu.memory_space<vmem>>, vector<8x1xf32>,
      %75 = tpu.iota {dimensions = array<i32: 0>} : vector<8x1xi32>
      %c2_i32 = arith.constant 2 : i32
      %76 = vector.broadcast %c2_i32 : i32 to vector<8x1xi32>
      %77 = arith.cmpi slt, %75, %76 : vector<8x1xi32>
      %cst_52 = arith.constant -1.000000e+30 : f32
      %78 = vector.broadcast %cst_52 : f32 to vector<8x1xf32>
      %79 = arith.select %77, %73, %78 : vector<8x1xi1>, vector<8x1xf32>
      %cst_53 = arith.constant dense<0xFF800000> : vector<1xf32>
      %80 = vector.multi_reduction <maximumf>, %79, %cst_53 [0] : vector<8x1xf32> to vector<1xf32>
      %81 = vector.shape_cast %80 : vector<1xf32> to vector<1x1xf32>
      %82 = vector.broadcast %81 : vector<1x1xf32> to vector<8x1xf32>
      %83 = arith.subf %79, %82 : vector<8x1xf32>
      %84 = math.exp %83 : vector<8x1xf32>
      %cst_54 = arith.constant dense<0.000000e+00> : vector<1xf32>
      %85 = vector.multi_reduction <add>, %84, %cst_54 [0] : vector<8x1xf32> to vector<1xf32>
      %86 = vector.shape_cast %85 : vector<1xf32> to vector<1x1xf32>
      %87 = vector.broadcast %86 : vector<1x1xf32> to vector<8x1xf32>
      %88 = arith.divf %84, %87 : vector<8x1xf32>
      %c0_55 = arith.constant 0 : index
      %c0_56 = arith.constant 0 : index
      %89 = vector.load %arg12[%c0_55, %c0_56] : memref<8x1xf32, #tpu.memory_space<vmem>>, vector<8x1xf32>
      tpu.vector_store %arg12[%c0_55, %c0_56], %88 {strides = array<i32>} : memref<8x1xf32, #tpu.memory_space<vmem>>, vector<8x1xf32>,
    } else {
    }
    return
  }
  func.func @transform_0(%arg0: i32) -> (i32, i32) {
    %c0_i32 = arith.constant 0 : i32
    %c0_i32_0 = arith.constant 0 : i32
    return %arg0, %c0_i32 : i32, i32
  }
  func.func @transform_1(%arg0: i32) -> (i32, i32) {
    %c0_i32 = arith.constant 0 : i32
    %c0_i32_0 = arith.constant 0 : i32
    %c0_i32_1 = arith.constant 0 : i32
    return %c0_i32, %c0_i32_0 : i32, i32
  }
  func.func @transform_2(%arg0: i32) -> (i32, i32) {
    %c0_i32 = arith.constant 0 : i32
    %c0_i32_0 = arith.constant 0 : i32
    %c0_i32_1 = arith.constant 0 : i32
    return %c0_i32, %c0_i32_0 : i32, i32
  }
  func.func @transform_3(%arg0: i32) -> (i32, i32) {
    %c0_i32 = arith.constant 0 : i32
    %c0_i32_0 = arith.constant 0 : i32
    %c0_i32_1 = arith.constant 0 : i32
    return %c0_i32, %c0_i32_0 : i32, i32
  }
  func.func @transform_4(%arg0: i32) -> (i32, i32) {
    %c0_i32 = arith.constant 0 : i32
    %c0_i32_0 = arith.constant 0 : i32
    %c0_i32_1 = arith.constant 0 : i32
    return %c0_i32, %c0_i32_0 : i32, i32
  }
  func.func @transform_5(%arg0: i32) -> (i32, i32) {
    %c0_i32 = arith.constant 0 : i32
    %c0_i32_0 = arith.constant 0 : i32
    %c0_i32_1 = arith.constant 0 : i32
    return %c0_i32, %c0_i32_0 : i32, i32
  }
  func.func @transform_6(%arg0: i32) -> (i32, i32) {
    %c0_i32 = arith.constant 0 : i32
    %c0_i32_0 = arith.constant 0 : i32
    %c0_i32_1 = arith.constant 0 : i32
    return %c0_i32, %c0_i32_0 : i32, i32
  }
  func.func @transform_7(%arg0: i32) -> (i32, i32) {
    %c0_i32 = arith.constant 0 : i32
    %c0_i32_0 = arith.constant 0 : i32
    %c0_i32_1 = arith.constant 0 : i32
    return %c0_i32, %c0_i32_0 : i32, i32
  }
  func.func @transform_8(%arg0: i32) -> (i32, i32) {
    %c0_i32 = arith.constant 0 : i32
    %c0_i32_0 = arith.constant 0 : i32
    %c0_i32_1 = arith.constant 0 : i32
    return %c0_i32, %c0_i32_0 : i32, i32
  }
  func.func @transform_9(%arg0: i32) -> (i32, i32) {
    %c0_i32 = arith.constant 0 : i32
    %c0_i32_0 = arith.constant 0 : i32
    return %c0_i32, %arg0 : i32, i32
  }
  func.func @transform_10(%arg0: i32) -> (i32, i32) {
    %c0_i32 = arith.constant 0 : i32
    %c0_i32_0 = arith.constant 0 : i32
    %c0_i32_1 = arith.constant 0 : i32
    return %c0_i32, %c0_i32_0 : i32, i32
  }
  func.func @transform_11(%arg0: i32) -> (i32, i32) {
    %c0_i32 = arith.constant 0 : i32
    %c0_i32_0 = arith.constant 0 : i32
    %c0_i32_1 = arith.constant 0 : i32
    return %c0_i32, %c0_i32_0 : i32, i32
  }
  func.func @transform_12(%arg0: i32) -> (i32, i32) {
    %c0_i32 = arith.constant 0 : i32
    %c0_i32_0 = arith.constant 0 : i32
    %c0_i32_1 = arith.constant 0 : i32
    return %c0_i32, %c0_i32_0 : i32, i32
  }
}

</mosaic_0001>

<llo_original>
// kernel: tpu_custom_call.1
$region0: #{tpu_custom_call.1}
  #allocation0 [shape = 'u32[]', space=smem, size = 0x4, offset = 0x4, fixed_abs, tag = 'smem constant byte address 0x4 - core index']
  #allocation1 [shape = 'u32[72,128]{1,0:T(1,128)}', space=vmem, size = 0x9000, scoped, tag = 'internal scratch']
  #allocation2 [shape = 'f32[8,1]{1,0:T(8,128)}', space=vmem, size = 0x1000, scoped, tag = 'scratch operand']
  #allocation3 [shape = 'f32[8,1]{1,0:T(8,128)}', space=vmem, size = 0x1000, scoped, tag = 'scratch operand']
  #allocation4 [shape = 'f32[8,512]{1,0:T(8,128)}', space=vmem, size = 0x4000, scoped, tag = 'scratch operand']
  #allocation5 [shape = 'f32[1,1]{1,0:T(1,128)S(1)}', space=vmem, size = 0x200, scoped, tag = 'scoped memory for tpu_custom_call.1']
  %s0 = inlined_call_operand.vmem [shape: f32[8,64], index: 0, kind: input, shape index: {}]
  %s1 = inlined_call_operand.vmem [shape: bf16[64,512], index: 1, kind: input, shape index: {}]
  %s2 = inlined_call_operand.vmem [shape: f32[1,512], index: 2, kind: input, shape index: {}]
  %s3 = inlined_call_operand.hbm [shape: bf16[512,512], index: 3, kind: input, shape index: {}]
  %s4 = inlined_call_operand.hbm [shape: f32[1,512], index: 4, kind: input, shape index: {}]
  %s5 = inlined_call_operand.vmem [shape: bf16[256,8], index: 5, kind: input, shape index: {}]
  %s6 = inlined_call_operand.vmem [shape: f32[8,1], index: 6, kind: input, shape index: {}]
  %s7 = inlined_call_operand.hbm [shape: f32[1,512], index: 7, kind: input, shape index: {}]
  %s8 = inlined_call_operand.<no memory space> [shape: f32[1,1], index: 8, kind: input, shape index: {}]
  %s9 = inlined_call_operand.hbm [shape: f32[8,8], index: 9, kind: output, shape index: {0}]
  %s10 = inlined_call_operand.vmem [shape: f32[8,1], index: 10, kind: output, shape index: {1}]
  %s11 = inlined_call_operand.vmem [shape: f32[8,1], index: 11, kind: output, shape index: {2}]
  %s12 = inlined_call_operand.hbm [shape: f32[8,512], index: 12, kind: output, shape index: {3}]
  %13 = xla_tuple %s9, %s10, %s11, %s12
  %s14 = sld [smem:[#allocation0]]
  $region90: #{tpu_custom_call.1} parent=0
    _
  %s16 = ssub.s32 1, %s14
  %s17 = scalar_select 0, %s16, %s14
  %v18 = vstv %s8
  %19 = vst [vmem:[#allocation5] sm:$0x1] %v18
  $region1: #{tpu_custom_call.1} parent=0
    #allocation6 [shape = 'u8[524288]{0}', space=vmem, size = 0x80000, scoped, tag = 'input window, operand 3, single buffered']
    #allocation7 [shape = 's32[1]{0}', space=sflag, size = 0x4, scoped, tag = 'scoped memory for tpu_custom_call.1']
    #allocation8 [shape = 's32[1]{0}', space=sflag, size = 0x4, scoped, tag = 'scoped memory for tpu_custom_call.1']
    #allocation9 [shape = 'u8[2048]{0}', space=vmem, size = 0x800, scoped, tag = 'input window, operand 4, single buffered']
    #allocation10 [shape = 's32[1]{0}', space=sflag, size = 0x4, scoped, tag = 'scoped memory for tpu_custom_call.1']
    #allocation11 [shape = 'u8[2048]{0}', space=vmem, size = 0x800, scoped, tag = 'input window, operand 7, single buffered']
    #allocation12 [shape = 'u8[4096]{0}', space=vmem, size = 0x1000, scoped, tag = 'output window, operand 0, single buffered']
    #allocation13 [shape = 'u8[16384]{0}', space=vmem, size = 0x4000, scoped, tag = 'output window, operand 3, single buffered']
    #allocation14 [shape = 's32[1]{0}', space=sflag, size = 0x4, scoped, tag = 'scoped memory for tpu_custom_call.1']
    %20 = vsyncpa [#allocation7], 0
    %21 = vsyncpa [#allocation10], 0
    %22 = vsyncpa [#allocation8], 0
    %23 = vsyncpa [#allocation14], 0
    // Predicated region
    $region2: #{tpu_custom_call.1} parent=1 // pred_check
      _
    $region3: #{tpu_custom_call.1} parent=1 // pred_check_branch
      %25 = sbr.rel (0) target = $region5
    $region4: #{tpu_custom_call.1} parent=1 // pred_region
      _
    $region5: #{tpu_custom_call.1} parent=1 // pred_fallthru
      _
    // Predicated region
    $region6: #{tpu_custom_call.1} parent=1 // pred_check
      _
    $region7: #{tpu_custom_call.1} parent=1 // pred_check_branch
      %27 = sbr.rel (0) target = $region9
    $region8: #{tpu_custom_call.1} parent=1 // pred_region
      _
    $region9: #{tpu_custom_call.1} parent=1 // pred_fallthru
      _
    // Predicated region
    $region10: #{tpu_custom_call.1} parent=1 // pred_check
      _
    $region11: #{tpu_custom_call.1} parent=1 // pred_check_branch
      %29 = sbr.rel (0) target = $region13
    $region12: #{tpu_custom_call.1} parent=1 // pred_region
      _
    $region13: #{tpu_custom_call.1} parent=1 // pred_fallthru
      _
    // Predicated region
    $region14: #{tpu_custom_call.1} parent=1 // pred_check
      _
    $region15: #{tpu_custom_call.1} parent=1 // pred_check_branch
      %31 = sbr.rel (0) target = $region17
    $region16: #{tpu_custom_call.1} parent=1 // pred_region
      %33 = vsyncadd [#allocation7], 0
      %s34 = sshll.u32 %s3, 4
      %s35 = int_to_ptr.hbm [resolvable:$true] %s34
      %s36 = sshll.u32 [#allocation6], 4
      %s37 = int_to_ptr.vmem [resolvable:$true] %s36
      %42 = dma.hbm_to_vmem [thread:$0]  %s35, 16384, %s37, [#allocation7], 256, 256, 16
    $region17: #{tpu_custom_call.1} parent=1 // pred_fallthru
      _
    // Predicated region
    $region18: #{tpu_custom_call.1} parent=1 // pred_check
      _
    $region19: #{tpu_custom_call.1} parent=1 // pred_check_branch
      %44 = sbr.rel (0) target = $region21
    $region20: #{tpu_custom_call.1} parent=1 // pred_region
      %46 = vsyncadd [#allocation10], 0
      %s48 = sshll.u32 %s4, 4
      %s49 = int_to_ptr.hbm [resolvable:$true] %s48
      %s50 = sshll.u32 [#allocation9], 4
      %s51 = int_to_ptr.vmem [resolvable:$true] %s50
      %53 = dma.hbm_to_vmem [thread:$0]  %s49, 64, %s51, [#allocation10]
    $region21: #{tpu_custom_call.1} parent=1 // pred_fallthru
      _
    // Predicated region
    $region22: #{tpu_custom_call.1} parent=1 // pred_check
      _
    $region23: #{tpu_custom_call.1} parent=1 // pred_check_branch
      %55 = sbr.rel (0) target = $region25
    $region24: #{tpu_custom_call.1} parent=1 // pred_region
      _
    $region25: #{tpu_custom_call.1} parent=1 // pred_fallthru
      _
    // Predicated region
    $region26: #{tpu_custom_call.1} parent=1 // pred_check
      _
    $region27: #{tpu_custom_call.1} parent=1 // pred_check_branch
      %57 = sbr.rel (0) target = $region29
    $region28: #{tpu_custom_call.1} parent=1 // pred_region
      _
    $region29: #{tpu_custom_call.1} parent=1 // pred_fallthru
      _
    // Predicated region
    $region30: #{tpu_custom_call.1} parent=1 // pred_check
      _
    $region31: #{tpu_custom_call.1} parent=1 // pred_check_branch
      %59 = sbr.rel (0) target = $region33
    $region32: #{tpu_custom_call.1} parent=1 // pred_region
      %61 = vsyncadd [#allocation10], 0
      %s63 = sshll.u32 %s7, 4
      %s64 = int_to_ptr.hbm [resolvable:$true] %s63
      %s65 = sshll.u32 [#allocation11], 4
      %s66 = int_to_ptr.vmem [resolvable:$true] %s65
      %68 = dma.hbm_to_vmem [thread:$0]  %s64, 64, %s66, [#allocation10]
    $region33: #{tpu_custom_call.1} parent=1 // pred_fallthru
      _
    // Predicated region
    $region34: #{tpu_custom_call.1} parent=1 // pred_check
      _
    $region35: #{tpu_custom_call.1} parent=1 // pred_check_branch
      %70 = sbr.rel (0) target = $region37
    $region36: #{tpu_custom_call.1} parent=1 // pred_region
      _
    $region37: #{tpu_custom_call.1} parent=1 // pred_fallthru
      _
    // Predicated region
    $region38: #{tpu_custom_call.1} parent=1 // pred_check
      _
    $region39: #{tpu_custom_call.1} parent=1 // pred_check_branch
      %72 = sbr.rel (0) target = $region41
    $region40: #{tpu_custom_call.1} parent=1 // pred_region
      %74 = dma.done [#allocation7], 16384
    $region41: #{tpu_custom_call.1} parent=1 // pred_fallthru
      _
    // Predicated region
    $region42: #{tpu_custom_call.1} parent=1 // pred_check
      _
    $region43: #{tpu_custom_call.1} parent=1 // pred_check_branch
      %76 = sbr.rel (0) target = $region45
    $region44: #{tpu_custom_call.1} parent=1 // pred_region
      %78 = dma.done [#allocation10], 64
    $region45: #{tpu_custom_call.1} parent=1 // pred_fallthru
      _
    // Predicated region
    $region46: #{tpu_custom_call.1} parent=1 // pred_check
      _
    $region47: #{tpu_custom_call.1} parent=1 // pred_check_branch
      %80 = sbr.rel (0) target = $region49
    $region48: #{tpu_custom_call.1} parent=1 // pred_region
      %82 = dma.done [#allocation10], 64
    $region49: #{tpu_custom_call.1} parent=1 // pred_fallthru
      _
    %p84 = scmp.eq.s32.totalorder 0, 0
    // Predicated region
    $region50: #{tpu_custom_call.1} parent=1 // pred_check
      %p85 = pneg %p84
    $region51: #{tpu_custom_call.1} parent=1 // pred_check_branch
      %87 = sbr.rel (%p85) target = $region53
    $region52: #{tpu_custom_call.1} parent=1 // pred_region
      %vm88 = vcmask 7168
      %89 = vst.msk [vmem:[#allocation2] sm:$0xff] %vm88, -1e+30
      %90 = vst.msk [vmem:[#allocation3] sm:$0xff] %vm88, 0.0
      %91 = vst [vmem:[#allocation4] sm:$0xff] 0.0
      %92 = vst [vmem:[#allocation4 + $0x8] sm:$0xff] 0.0
      %93 = vst [vmem:[#allocation4 + $0x10] sm:$0xff] 0.0
      %94 = vst [vmem:[#allocation4 + $0x18] sm:$0xff] 0.0
    $region53: #{tpu_custom_call.1} parent=1 // pred_fallthru
      _
    %v95 = vld [vmem:[%s0] sm:$0xff]
    %v96 = vpack.c.bf16 %v95, %v95
    %v97 = vld [vmem:[%s1] sm:$0xff]
    %v98 = vld [vmem:[%s1 + $0x8] sm:$0xff]
    %v99 = vld [vmem:[%s1 + $0x10] sm:$0xff]
    %v100 = vld [vmem:[%s1 + $0x18] sm:$0xff]
    %v101 = vld [vmem:[%s1 + $0x20] sm:$0xff]
    %v102 = vld [vmem:[%s1 + $0x28] sm:$0xff]
    %v103 = vld [vmem:[%s1 + $0x30] sm:$0xff]
    %v104 = vld [vmem:[%s1 + $0x38] sm:$0xff]
    %v105 = vld [vmem:[%s1 + $0x40] sm:$0xff]
    %v106 = vld [vmem:[%s1 + $0x48] sm:$0xff]
    %v107 = vld [vmem:[%s1 + $0x50] sm:$0xff]
    %v108 = vld [vmem:[%s1 + $0x58] sm:$0xff]
    %v109 = vld [vmem:[%s1 + $0x60] sm:$0xff]
    %v110 = vld [vmem:[%s1 + $0x68] sm:$0xff]
    %v111 = vld [vmem:[%s1 + $0x70] sm:$0xff]
    %v112 = vld [vmem:[%s1 + $0x78] sm:$0xff]
    %v113 = vld [vmem:[%s2] sm:$0xf]
    %v115 = vperm.slane %v113, 0
    %v116 = vperm.slane %v113, 1
    %v117 = vperm.slane %v113, 2
    %v118 = vperm.slane %v113, 3
    %v139 = vunpack.c.l.b16 %v97
    %v140 = vunpack.c.h.b16 %v97
    %v141 = vunpack.c.l.b16 %v98
    %v142 = vunpack.c.h.b16 %v98
    %v143 = vunpack.c.l.b16 %v99
    %v144 = vunpack.c.h.b16 %v99
    %v145 = vunpack.c.l.b16 %v100
    %v146 = vunpack.c.h.b16 %v100
    %v147 = vunpack.c.l.b16 %v101
    %v148 = vunpack.c.h.b16 %v101
    %v149 = vunpack.c.l.b16 %v102
    %v150 = vunpack.c.h.b16 %v102
    %v151 = vunpack.c.l.b16 %v103
    %v152 = vunpack.c.h.b16 %v103
    %v153 = vunpack.c.l.b16 %v104
    %v154 = vunpack.c.h.b16 %v104
    %v155 = vunpack.c.l.b16 %v105
    %v156 = vunpack.c.h.b16 %v105
    %v157 = vunpack.c.l.b16 %v106
    %v158 = vunpack.c.h.b16 %v106
    %v159 = vunpack.c.l.b16 %v107
    %v160 = vunpack.c.h.b16 %v107
    %v161 = vunpack.c.l.b16 %v108
    %v162 = vunpack.c.h.b16 %v108
    %v163 = vunpack.c.l.b16 %v109
    %v164 = vunpack.c.h.b16 %v109
    %v165 = vunpack.c.l.b16 %v110
    %v166 = vunpack.c.h.b16 %v110
    %v167 = vunpack.c.l.b16 %v111
    %v168 = vunpack.c.h.b16 %v111
    %v169 = vunpack.c.l.b16 %v112
    %v170 = vunpack.c.h.b16 %v112
    %v171 = vpack.c.b16 %v143, %v139
    %v172 = vpack.c.b16 %v144, %v140
    %v173 = vpack.c.b16 %v145, %v141
    %v174 = vpack.c.b16 %v146, %v142
    %v175 = vpack.c.b16 %v151, %v147
    %v176 = vpack.c.b16 %v152, %v148
    %v177 = vpack.c.b16 %v153, %v149
    %v178 = vpack.c.b16 %v154, %v150
    %v179 = vpack.c.b16 %v159, %v155
    %v180 = vpack.c.b16 %v160, %v156
    %v181 = vpack.c.b16 %v161, %v157
    %v182 = vpack.c.b16 %v162, %v158
    %v183 = vpack.c.b16 %v167, %v163
    %v184 = vpack.c.b16 %v168, %v164
    %v185 = vpack.c.b16 %v169, %v165
    %v186 = vpack.c.b16 %v170, %v166
    %vm203 = vcmask 523264
    %v205 = vsel %vm203, %v96, 0
    %207 = vmatpush.bf16.msra.mxu0 0
    %208 = vmatpush.bf16.msra.mxu0 0
    %209 = vmatpush.bf16.msra.mxu0 0
    %210 = vmatpush.bf16.msra.mxu0 0
    %211 = vmatpush.bf16.msra.mxu0 %v183
    %212 = vmatpush.bf16.msra.mxu0 %v179
    %213 = vmatpush.bf16.msra.mxu0 %v175
    %214 = vmatpush.bf16.msra.mxu0 %v171
    %215 = vmatmul.bf16.gmra.mxu0 %v205
    %v216 = vpop.f32.mrf.mxu0
    %v217 = vadd.f32 %v115, %v216
    %v218 = vpop.f32.mrf.mxu0
    %219 = vdwg.mxu0
    %220 = vmatpush.bf16.msra.mxu0 0
    %221 = vmatpush.bf16.msra.mxu0 0
    %222 = vmatpush.bf16.msra.mxu0 0
    %223 = vmatpush.bf16.msra.mxu0 0
    %224 = vmatpush.bf16.msra.mxu0 %v184
    %225 = vmatpush.bf16.msra.mxu0 %v180
    %226 = vmatpush.bf16.msra.mxu0 %v176
    %227 = vmatpush.bf16.msra.mxu0 %v172
    %228 = vmatmul.bf16.gmra.mxu0 %v205
    %v229 = vpop.f32.mrf.mxu0
    %v230 = vadd.f32 %v116, %v229
    %v231 = vpop.f32.mrf.mxu0
    %232 = vdwg.mxu0
    %233 = vmatpush.bf16.msra.mxu0 0
    %234 = vmatpush.bf16.msra.mxu0 0
    %235 = vmatpush.bf16.msra.mxu0 0
    %236 = vmatpush.bf16.msra.mxu0 0
    %237 = vmatpush.bf16.msra.mxu0 %v185
    %238 = vmatpush.bf16.msra.mxu0 %v181
    %239 = vmatpush.bf16.msra.mxu0 %v177
    %240 = vmatpush.bf16.msra.mxu0 %v173
    %241 = vmatmul.bf16.gmra.mxu0 %v205
    %v242 = vpop.f32.mrf.mxu0
    %v243 = vadd.f32 %v117, %v242
    %v244 = vpop.f32.mrf.mxu0
    %245 = vdwg.mxu0
    %246 = vmatpush.bf16.msra.mxu0 0
    %247 = vmatpush.bf16.msra.mxu0 0
    %248 = vmatpush.bf16.msra.mxu0 0
    %249 = vmatpush.bf16.msra.mxu0 0
    %250 = vmatpush.bf16.msra.mxu0 %v186
    %251 = vmatpush.bf16.msra.mxu0 %v182
    %252 = vmatpush.bf16.msra.mxu0 %v178
    %253 = vmatpush.bf16.msra.mxu0 %v174
    %254 = vmatmul.bf16.gmra.mxu0 %v205
    %v255 = vpop.f32.mrf.mxu0
    %v256 = vadd.f32 %v118, %v255
    %v257 = vpop.f32.mrf.mxu0
    %258 = vdwg.mxu0
    %v259 = vmax.f32 %v217, 0.0
    %v260 = vmax.f32 %v230, 0.0
    %v261 = vmax.f32 %v243, 0.0
    %v262 = vmax.f32 %v256, 0.0
    %v263 = vpack.c.bf16 %v259, %v259
    %v264 = vpack.c.bf16 %v260, %v260
    %v265 = vpack.c.bf16 %v261, %v261
    %v266 = vpack.c.bf16 %v262, %v262
    %v267 = vld [vmem:[#allocation6] sm:$0xff]
    %v268 = vld [vmem:[#allocation6 + $0x8] sm:$0xff]
    %v269 = vld [vmem:[#allocation6 + $0x10] sm:$0xff]
    %v270 = vld [vmem:[#allocation6 + $0x18] sm:$0xff]
    %v271 = vld [vmem:[#allocation6 + $0x20] sm:$0xff]
    %v272 = vld [vmem:[#allocation6 + $0x28] sm:$0xff]
    %v273 = vld [vmem:[#allocation6 + $0x30] sm:$0xff]
    %v274 = vld [vmem:[#allocation6 + $0x38] sm:$0xff]
    %v275 = vld [vmem:[#allocation6 + $0x40] sm:$0xff]
    %v276 = vld [vmem:[#allocation6 + $0x48] sm:$0xff]
    %v277 = vld [vmem:[#allocation6 + $0x50] sm:$0xff]
    %v278 = vld [vmem:[#allocation6 + $0x58] sm:$0xff]
    %v279 = vld [vmem:[#allocation6 + $0x60] sm:$0xff]
    %v280 = vld [vmem:[#allocation6 + $0x68] sm:$0xff]
    %v281 = vld [vmem:[#allocation6 + $0x70] sm:$0xff]
    %v282 = vld [vmem:[#allocation6 + $0x78] sm:$0xff]
    %v283 = vld [vmem:[#allocation6 + $0x80] sm:$0xff]
    %v284 = vld [vmem:[#allocation6 + $0x88] sm:$0xff]
    %v285 = vld [vmem:[#allocation6 + $0x90] sm:$0xff]
    %v286 = vld [vmem:[#allocation6 + $0x98] sm:$0xff]
    %v287 = vld [vmem:[#allocation6 + $0xa0] sm:$0xff]
    %v288 = vld [vmem:[#allocation6 + $0xa8] sm:$0xff]
    %v289 = vld [vmem:[#allocation6 + $0xb0] sm:$0xff]
    %v290 = vld [vmem:[#allocation6 + $0xb8] sm:$0xff]
    %v291 = vld [vmem:[#allocation6 + $0xc0] sm:$0xff]
    %v292 = vld [vmem:[#allocation6 + $0xc8] sm:$0xff]
    %v293 = vld [vmem:[#allocation6 + $0xd0] sm:$0xff]
    %v294 = vld [vmem:[#allocation6 + $0xd8] sm:$0xff]
    %v295 = vld [vmem:[#allocation6 + $0xe0] sm:$0xff]
    %v296 = vld [vmem:[#allocation6 + $0xe8] sm:$0xff]
    %v297 = vld [vmem:[#allocation6 + $0xf0] sm:$0xff]
    %v298 = vld [vmem:[#allocation6 + $0xf8] sm:$0xff]
    %v299 = vld [vmem:[#allocation6 + $0x100] sm:$0xff]
    %v300 = vld [vmem:[#allocation6 + $0x108] sm:$0xff]
    %v301 = vld [vmem:[#allocation6 + $0x110] sm:$0xff]
    %v302 = vld [vmem:[#allocation6 + $0x118] sm:$0xff]
    %v303 = vld [vmem:[#allocation6 + $0x120] sm:$0xff]
    %v304 = vld [vmem:[#allocation6 + $0x128] sm:$0xff]
    %v305 = vld [vmem:[#allocation6 + $0x130] sm:$0xff]
    %v306 = vld [vmem:[#allocation6 + $0x138] sm:$0xff]
    %v307 = vld [vmem:[#allocation6 + $0x140] sm:$0xff]
    %v308 = vld [vmem:[#allocation6 + $0x148] sm:$0xff]
    %v309 = vld [vmem:[#allocation6 + $0x150] sm:$0xff]
    %v310 = vld [vmem:[#allocation6 + $0x158] sm:$0xff]
    %v311 = vld [vmem:[#allocation6 + $0x160] sm:$0xff]
    %v312 = vld [vmem:[#allocation6 + $0x168] sm:$0xff]
    %v313 = vld [vmem:[#allocation6 + $0x170] sm:$0xff]
    %v314 = vld [vmem:[#allocation6 + $0x178] sm:$0xff]
    %v315 = vld [vmem:[#allocation6 + $0x180] sm:$0xff]
    %v316 = vld [vmem:[#allocation6 + $0x188] sm:$0xff]
    %v317 = vld [vmem:[#allocation6 + $0x190] sm:$0xff]
    %v318 = vld [vmem:[#allocation6 + $0x198] sm:$0xff]
    %v319 = vld [vmem:[#allocation6 + $0x1a0] sm:$0xff]
    %v320 = vld [vmem:[#allocation6 + $0x1a8] sm:$0xff]
    %v321 = vld [vmem:[#allocation6 + $0x1b0] sm:$0xff]
    %v322 = vld [vmem:[#allocation6 + $0x1b8] sm:$0xff]
    %v323 = vld [vmem:[#allocation6 + $0x1c0] sm:$0xff]
    %v324 = vld [vmem:[#allocation6 + $0x1c8] sm:$0xff]
    %v325 = vld [vmem:[#allocation6 + $0x1d0] sm:$0xff]
    %v326 = vld [vmem:[#allocation6 + $0x1d8] sm:$0xff]
    %v327 = vld [vmem:[#allocation6 + $0x1e0] sm:$0xff]
    %v328 = vld [vmem:[#allocation6 + $0x1e8] sm:$0xff]
    %v329 = vld [vmem:[#allocation6 + $0x1f0] sm:$0xff]
    %v330 = vld [vmem:[#allocation6 + $0x1f8] sm:$0xff]
    %v331 = vld [vmem:[#allocation6 + $0x200] sm:$0xff]
    %v332 = vld [vmem:[#allocation6 + $0x208] sm:$0xff]
    %v333 = vld [vmem:[#allocation6 + $0x210] sm:$0xff]
    %v334 = vld [vmem:[#allocation6 + $0x218] sm:$0xff]
    %v335 = vld [vmem:[#allocation6 + $0x220] sm:$0xff]
    %v336 = vld [vmem:[#allocation6 + $0x228] sm:$0xff]
    %v337 = vld [vmem:[#allocation6 + $0x230] sm:$0xff]
    %v338 = vld [vmem:[#allocation6 + $0x238] sm:$0xff]
    %v339 = vld [vmem:[#allocation6 + $0x240] sm:$0xff]
    %v340 = vld [vmem:[#allocation6 + $0x248] sm:$0xff]
    %v341 = vld [vmem:[#allocation6 + $0x250] sm:$0xff]
    %v342 = vld [vmem:[#allocation6 + $0x258] sm:$0xff]
    %v343 = vld [vmem:[#allocation6 + $0x260] sm:$0xff]
    %v344 = vld [vmem:[#allocation6 + $0x268] sm:$0xff]
    %v345 = vld [vmem:[#allocation6 + $0x270] sm:$0xff]
    %v346 = vld [vmem:[#allocation6 + $0x278] sm:$0xff]
    %v347 = vld [vmem:[#allocation6 + $0x280] sm:$0xff]
    %v348 = vld [vmem:[#allocation6 + $0x288] sm:$0xff]
    %v349 = vld [vmem:[#allocation6 + $0x290] sm:$0xff]
    %v350 = vld [vmem:[#allocation6 + $0x298] sm:$0xff]
    %v351 = vld [vmem:[#allocation6 + $0x2a0] sm:$0xff]
    %v352 = vld [vmem:[#allocation6 + $0x2a8] sm:$0xff]
    %v353 = vld [vmem:[#allocation6 + $0x2b0] sm:$0xff]
    %v354 = vld [vmem:[#allocation6 + $0x2b8] sm:$0xff]
    %v355 = vld [vmem:[#allocation6 + $0x2c0] sm:$0xff]
    %v356 = vld [vmem:[#allocation6 + $0x2c8] sm:$0xff]
    %v357 = vld [vmem:[#allocation6 + $0x2d0] sm:$0xff]
    %v358 = vld [vmem:[#allocation6 + $0x2d8] sm:$0xff]
    %v359 = vld [vmem:[#allocation6 + $0x2e0] sm:$0xff]
    %v360 = vld [vmem:[#allocation6 + $0x2e8] sm:$0xff]
    %v361 = vld [vmem:[#allocation6 + $0x2f0] sm:$0xff]
    %v362 = vld [vmem:[#allocation6 + $0x2f8] sm:$0xff]
    %v363 = vld [vmem:[#allocation6 + $0x300] sm:$0xff]
    %v364 = vld [vmem:[#allocation6 + $0x308] sm:$0xff]
    %v365 = vld [vmem:[#allocation6 + $0x310] sm:$0xff]
    %v366 = vld [vmem:[#allocation6 + $0x318] sm:$0xff]
    %v367 = vld [vmem:[#allocation6 + $0x320] sm:$0xff]
    %v368 = vld [vmem:[#allocation6 + $0x328] sm:$0xff]
    %v369 = vld [vmem:[#allocation6 + $0x330] sm:$0xff]
    %v370 = vld [vmem:[#allocation6 + $0x338] sm:$0xff]
    %v371 = vld [vmem:[#allocation6 + $0x340] sm:$0xff]
    %v372 = vld [vmem:[#allocation6 + $0x348] sm:$0xff]
    %v373 = vld [vmem:[#allocation6 + $0x350] sm:$0xff]
    %v374 = vld [vmem:[#allocation6 + $0x358] sm:$0xff]
    %v375 = vld [vmem:[#allocation6 + $0x360] sm:$0xff]
    %v376 = vld [vmem:[#allocation6 + $0x368] sm:$0xff]
    %v377 = vld [vmem:[#allocation6 + $0x370] sm:$0xff]
    %v378 = vld [vmem:[#allocation6 + $0x378] sm:$0xff]
    %v379 = vld [vmem:[#allocation6 + $0x380] sm:$0xff]
    %v380 = vld [vmem:[#allocation6 + $0x388] sm:$0xff]
    %v381 = vld [vmem:[#allocation6 + $0x390] sm:$0xff]
    %v382 = vld [vmem:[#allocation6 + $0x398] sm:$0xff]
    %v383 = vld [vmem:[#allocation6 + $0x3a0] sm:$0xff]
    %v384 = vld [vmem:[#allocation6 + $0x3a8] sm:$0xff]
    %v385 = vld [vmem:[#allocation6 + $0x3b0] sm:$0xff]
    %v386 = vld [vmem:[#allocation6 + $0x3b8] sm:$0xff]
    %v387 = vld [vmem:[#allocation6 + $0x3c0] sm:$0xff]
    %v388 = vld [vmem:[#allocation6 + $0x3c8] sm:$0xff]
    %v389 = vld [vmem:[#allocation6 + $0x3d0] sm:$0xff]
    %v390 = vld [vmem:[#allocation6 + $0x3d8] sm:$0xff]
    %v391 = vld [vmem:[#allocation6 + $0x3e0] sm:$0xff]
    %v392 = vld [vmem:[#allocation6 + $0x3e8] sm:$0xff]
    %v393 = vld [vmem:[#allocation6 + $0x3f0] sm:$0xff]
    %v394 = vld [vmem:[#allocation6 + $0x3f8] sm:$0xff]
    %v395 = vld [vmem:[#allocation9] sm:$0xf]
    %v397 = vperm.slane %v395, 0
    %v398 = vperm.slane %v395, 1
    %v399 = vperm.slane %v395, 2
    %v400 = vperm.slane %v395, 3
    %v533 = vunpack.c.l.b16 %v267
    %v534 = vunpack.c.h.b16 %v267
    %v535 = vunpack.c.l.b16 %v268
    %v536 = vunpack.c.h.b16 %v268
    %v537 = vunpack.c.l.b16 %v269
    %v538 = vunpack.c.h.b16 %v269
    %v539 = vunpack.c.l.b16 %v270
    %v540 = vunpack.c.h.b16 %v270
    %v541 = vunpack.c.l.b16 %v271
    %v542 = vunpack.c.h.b16 %v271
    %v543 = vunpack.c.l.b16 %v272
    %v544 = vunpack.c.h.b16 %v272
    %v545 = vunpack.c.l.b16 %v273
    %v546 = vunpack.c.h.b16 %v273
    %v547 = vunpack.c.l.b16 %v274
    %v548 = vunpack.c.h.b16 %v274
    %v549 = vunpack.c.l.b16 %v275
    %v550 = vunpack.c.h.b16 %v275
    %v551 = vunpack.c.l.b16 %v276
    %v552 = vunpack.c.h.b16 %v276
    %v553 = vunpack.c.l.b16 %v277
    %v554 = vunpack.c.h.b16 %v277
    %v555 = vunpack.c.l.b16 %v278
    %v556 = vunpack.c.h.b16 %v278
    %v557 = vunpack.c.l.b16 %v279
    %v558 = vunpack.c.h.b16 %v279
    %v559 = vunpack.c.l.b16 %v280
    %v560 = vunpack.c.h.b16 %v280
    %v561 = vunpack.c.l.b16 %v281
    %v562 = vunpack.c.h.b16 %v281
    %v563 = vunpack.c.l.b16 %v282
    %v564 = vunpack.c.h.b16 %v282
    %v565 = vunpack.c.l.b16 %v283
    %v566 = vunpack.c.h.b16 %v283
    %v567 = vunpack.c.l.b16 %v284
    %v568 = vunpack.c.h.b16 %v284
    %v569 = vunpack.c.l.b16 %v285
    %v570 = vunpack.c.h.b16 %v285
    %v571 = vunpack.c.l.b16 %v286
    %v572 = vunpack.c.h.b16 %v286
    %v573 = vunpack.c.l.b16 %v287
    %v574 = vunpack.c.h.b16 %v287
    %v575 = vunpack.c.l.b16 %v288
    %v576 = vunpack.c.h.b16 %v288
    %v577 = vunpack.c.l.b16 %v289
    %v578 = vunpack.c.h.b16 %v289
    %v579 = vunpack.c.l.b16 %v290
    %v580 = vunpack.c.h.b16 %v290
    %v581 = vunpack.c.l.b16 %v291
    %v582 = vunpack.c.h.b16 %v291
    %v583 = vunpack.c.l.b16 %v292
    %v584 = vunpack.c.h.b16 %v292
    %v585 = vunpack.c.l.b16 %v293
    %v586 = vunpack.c.h.b16 %v293
    %v587 = vunpack.c.l.b16 %v294
    %v588 = vunpack.c.h.b16 %v294
    %v589 = vunpack.c.l.b16 %v295
    %v590 = vunpack.c.h.b16 %v295
    %v591 = vunpack.c.l.b16 %v296
    %v592 = vunpack.c.h.b16 %v296
    %v593 = vunpack.c.l.b16 %v297
    %v594 = vunpack.c.h.b16 %v297
    %v595 = vunpack.c.l.b16 %v298
    %v596 = vunpack.c.h.b16 %v298
    %v597 = vunpack.c.l.b16 %v299
    %v598 = vunpack.c.h.b16 %v299
    %v599 = vunpack.c.l.b16 %v300
    %v600 = vunpack.c.h.b16 %v300
    %v601 = vunpack.c.l.b16 %v301
    %v602 = vunpack.c.h.b16 %v301
    %v603 = vunpack.c.l.b16 %v302
    %v604 = vunpack.c.h.b16 %v302
    %v605 = vunpack.c.l.b16 %v303
    %v606 = vunpack.c.h.b16 %v303
    %v607 = vunpack.c.l.b16 %v304
    %v608 = vunpack.c.h.b16 %v304
    %v609 = vunpack.c.l.b16 %v305
    %v610 = vunpack.c.h.b16 %v305
    %v611 = vunpack.c.l.b16 %v306
    %v612 = vunpack.c.h.b16 %v306
    %v613 = vunpack.c.l.b16 %v307
    %v614 = vunpack.c.h.b16 %v307
    %v615 = vunpack.c.l.b16 %v308
    %v616 = vunpack.c.h.b16 %v308
    %v617 = vunpack.c.l.b16 %v309
    %v618 = vunpack.c.h.b16 %v309
    %v619 = vunpack.c.l.b16 %v310
    %v620 = vunpack.c.h.b16 %v310
    %v621 = vunpack.c.l.b16 %v311
    %v622 = vunpack.c.h.b16 %v311
    %v623 = vunpack.c.l.b16 %v312
    %v624 = vunpack.c.h.b16 %v312
    %v625 = vunpack.c.l.b16 %v313
    %v626 = vunpack.c.h.b16 %v313
    %v627 = vunpack.c.l.b16 %v314
    %v628 = vunpack.c.h.b16 %v314
    %v629 = vunpack.c.l.b16 %v315
    %v630 = vunpack.c.h.b16 %v315
    %v631 = vunpack.c.l.b16 %v316
    %v632 = vunpack.c.h.b16 %v316
    %v633 = vunpack.c.l.b16 %v317
    %v634 = vunpack.c.h.b16 %v317
    %v635 = vunpack.c.l.b16 %v318
    %v636 = vunpack.c.h.b16 %v318
    %v637 = vunpack.c.l.b16 %v319
    %v638 = vunpack.c.h.b16 %v319
    %v639 = vunpack.c.l.b16 %v320
    %v640 = vunpack.c.h.b16 %v320
    %v641 = vunpack.c.l.b16 %v321
    %v642 = vunpack.c.h.b16 %v321
    %v643 = vunpack.c.l.b16 %v322
    %v644 = vunpack.c.h.b16 %v322
    %v645 = vunpack.c.l.b16 %v323
    %v646 = vunpack.c.h.b16 %v323
    %v647 = vunpack.c.l.b16 %v324
    %v648 = vunpack.c.h.b16 %v324
    %v649 = vunpack.c.l.b16 %v325
    %v650 = vunpack.c.h.b16 %v325
    %v651 = vunpack.c.l.b16 %v326
    %v652 = vunpack.c.h.b16 %v326
    %v653 = vunpack.c.l.b16 %v327
    %v654 = vunpack.c.h.b16 %v327
    %v655 = vunpack.c.l.b16 %v328
    %v656 = vunpack.c.h.b16 %v328
    %v657 = vunpack.c.l.b16 %v329
    %v658 = vunpack.c.h.b16 %v329
    %v659 = vunpack.c.l.b16 %v330
    %v660 = vunpack.c.h.b16 %v330
    %v661 = vunpack.c.l.b16 %v331
    %v662 = vunpack.c.h.b16 %v331
    %v663 = vunpack.c.l.b16 %v332
    %v664 = vunpack.c.h.b16 %v332
    %v665 = vunpack.c.l.b16 %v333
    %v666 = vunpack.c.h.b16 %v333
    %v667 = vunpack.c.l.b16 %v334
    %v668 = vunpack.c.h.b16 %v334
    %v669 = vunpack.c.l.b16 %v335
    %v670 = vunpack.c.h.b16 %v335
    %v671 = vunpack.c.l.b16 %v336
    %v672 = vunpack.c.h.b16 %v336
    %v673 = vunpack.c.l.b16 %v337
    %v674 = vunpack.c.h.b16 %v337
    %v675 = vunpack.c.l.b16 %v338
    %v676 = vunpack.c.h.b16 %v338
    %v677 = vunpack.c.l.b16 %v339
    %v678 = vunpack.c.h.b16 %v339
    %v679 = vunpack.c.l.b16 %v340
    %v680 = vunpack.c.h.b16 %v340
    %v681 = vunpack.c.l.b16 %v341
    %v682 = vunpack.c.h.b16 %v341
    %v683 = vunpack.c.l.b16 %v342
    %v684 = vunpack.c.h.b16 %v342
    %v685 = vunpack.c.l.b16 %v343
    %v686 = vunpack.c.h.b16 %v343
    %v687 = vunpack.c.l.b16 %v344
    %v688 = vunpack.c.h.b16 %v344
    %v689 = vunpack.c.l.b16 %v345
    %v690 = vunpack.c.h.b16 %v345
    %v691 = vunpack.c.l.b16 %v346
    %v692 = vunpack.c.h.b16 %v346
    %v693 = vunpack.c.l.b16 %v347
    %v694 = vunpack.c.h.b16 %v347
    %v695 = vunpack.c.l.b16 %v348
    %v696 = vunpack.c.h.b16 %v348
    %v697 = vunpack.c.l.b16 %v349
    %v698 = vunpack.c.h.b16 %v349
    %v699 = vunpack.c.l.b16 %v350
    %v700 = vunpack.c.h.b16 %v350
    %v701 = vunpack.c.l.b16 %v351
    %v702 = vunpack.c.h.b16 %v351
    %v703 = vunpack.c.l.b16 %v352
    %v704 = vunpack.c.h.b16 %v352
    %v705 = vunpack.c.l.b16 %v353
    %v706 = vunpack.c.h.b16 %v353
    %v707 = vunpack.c.l.b16 %v354
    %v708 = vunpack.c.h.b16 %v354
    %v709 = vunpack.c.l.b16 %v355
    %v710 = vunpack.c.h.b16 %v355
    %v711 = vunpack.c.l.b16 %v356
    %v712 = vunpack.c.h.b16 %v356
    %v713 = vunpack.c.l.b16 %v357
    %v714 = vunpack.c.h.b16 %v357
    %v715 = vunpack.c.l.b16 %v358
    %v716 = vunpack.c.h.b16 %v358
    %v717 = vunpack.c.l.b16 %v359
    %v718 = vunpack.c.h.b16 %v359
    %v719 = vunpack.c.l.b16 %v360
    %v720 = vunpack.c.h.b16 %v360
    %v721 = vunpack.c.l.b16 %v361
    %v722 = vunpack.c.h.b16 %v361
    %v723 = vunpack.c.l.b16 %v362
    %v724 = vunpack.c.h.b16 %v362
    %v725 = vunpack.c.l.b16 %v363
    %v726 = vunpack.c.h.b16 %v363
    %v727 = vunpack.c.l.b16 %v364
    %v728 = vunpack.c.h.b16 %v364
    %v729 = vunpack.c.l.b16 %v365
    %v730 = vunpack.c.h.b16 %v365
    %v731 = vunpack.c.l.b16 %v366
    %v732 = vunpack.c.h.b16 %v366
    %v733 = vunpack.c.l.b16 %v367
    %v734 = vunpack.c.h.b16 %v367
    %v735 = vunpack.c.l.b16 %v368
    %v736 = vunpack.c.h.b16 %v368
    %v737 = vunpack.c.l.b16 %v369
    %v738 = vunpack.c.h.b16 %v369
    %v739 = vunpack.c.l.b16 %v370
    %v740 = vunpack.c.h.b16 %v370
    %v741 = vunpack.c.l.b16 %v371
    %v742 = vunpack.c.h.b16 %v371
    %v743 = vunpack.c.l.b16 %v372
    %v744 = vunpack.c.h.b16 %v372
    %v745 = vunpack.c.l.b16 %v373
    %v746 = vunpack.c.h.b16 %v373
    %v747 = vunpack.c.l.b16 %v374
    %v748 = vunpack.c.h.b16 %v374
    %v749 = vunpack.c.l.b16 %v375
    %v750 = vunpack.c.h.b16 %v375
    %v751 = vunpack.c.l.b16 %v376
    %v752 = vunpack.c.h.b16 %v376
    %v753 = vunpack.c.l.b16 %v377
    %v754 = vunpack.c.h.b16 %v377
    %v755 = vunpack.c.l.b16 %v378
    %v756 = vunpack.c.h.b16 %v378
    %v757 = vunpack.c.l.b16 %v379
    %v758 = vunpack.c.h.b16 %v379
    %v759 = vunpack.c.l.b16 %v380
    %v760 = vunpack.c.h.b16 %v380
    %v761 = vunpack.c.l.b16 %v381
    %v762 = vunpack.c.h.b16 %v381
    %v763 = vunpack.c.l.b16 %v382
    %v764 = vunpack.c.h.b16 %v382
    %v765 = vunpack.c.l.b16 %v383
    %v766 = vunpack.c.h.b16 %v383
    %v767 = vunpack.c.l.b16 %v384
    %v768 = vunpack.c.h.b16 %v384
    %v769 = vunpack.c.l.b16 %v385
    %v770 = vunpack.c.h.b16 %v385
    %v771 = vunpack.c.l.b16 %v386
    %v772 = vunpack.c.h.b16 %v386
    %v773 = vunpack.c.l.b16 %v387
    %v774 = vunpack.c.h.b16 %v387
    %v775 = vunpack.c.l.b16 %v388
    %v776 = vunpack.c.h.b16 %v388
    %v777 = vunpack.c.l.b16 %v389
    %v778 = vunpack.c.h.b16 %v389
    %v779 = vunpack.c.l.b16 %v390
    %v780 = vunpack.c.h.b16 %v390
    %v781 = vunpack.c.l.b16 %v391
    %v782 = vunpack.c.h.b16 %v391
    %v783 = vunpack.c.l.b16 %v392
    %v784 = vunpack.c.h.b16 %v392
    %v785 = vunpack.c.l.b16 %v393
    %v786 = vunpack.c.h.b16 %v393
    %v787 = vunpack.c.l.b16 %v394
    %v788 = vunpack.c.h.b16 %v394
    %v789 = vpack.c.b16 %v537, %v533
    %v790 = vpack.c.b16 %v538, %v534
    %v791 = vpack.c.b16 %v539, %v535
    %v792 = vpack.c.b16 %v540, %v536
    %v793 = vpack.c.b16 %v545, %v541
    %v794 = vpack.c.b16 %v546, %v542
    %v795 = vpack.c.b16 %v547, %v543
    %v796 = vpack.c.b16 %v548, %v544
    %v797 = vpack.c.b16 %v553, %v549
    %v798 = vpack.c.b16 %v554, %v550
    %v799 = vpack.c.b16 %v555, %v551
    %v800 = vpack.c.b16 %v556, %v552
    %v801 = vpack.c.b16 %v561, %v557
    %v802 = vpack.c.b16 %v562, %v558
    %v803 = vpack.c.b16 %v563, %v559
    %v804 = vpack.c.b16 %v564, %v560
    %v805 = vpack.c.b16 %v569, %v565
    %v806 = vpack.c.b16 %v570, %v566
    %v807 = vpack.c.b16 %v571, %v567
    %v808 = vpack.c.b16 %v572, %v568
    %v809 = vpack.c.b16 %v577, %v573
    %v810 = vpack.c.b16 %v578, %v574
    %v811 = vpack.c.b16 %v579, %v575
    %v812 = vpack.c.b16 %v580, %v576
    %v813 = vpack.c.b16 %v585, %v581
    %v814 = vpack.c.b16 %v586, %v582
    %v815 = vpack.c.b16 %v587, %v583
    %v816 = vpack.c.b16 %v588, %v584
    %v817 = vpack.c.b16 %v593, %v589
    %v818 = vpack.c.b16 %v594, %v590
    %v819 = vpack.c.b16 %v595, %v591
    %v820 = vpack.c.b16 %v596, %v592
    %v821 = vpack.c.b16 %v601, %v597
    %v822 = vpack.c.b16 %v602, %v598
    %v823 = vpack.c.b16 %v603, %v599
    %v824 = vpack.c.b16 %v604, %v600
    %v825 = vpack.c.b16 %v609, %v605
    %v826 = vpack.c.b16 %v610, %v606
    %v827 = vpack.c.b16 %v611, %v607
    %v828 = vpack.c.b16 %v612, %v608
    %v829 = vpack.c.b16 %v617, %v613
    %v830 = vpack.c.b16 %v618, %v614
    %v831 = vpack.c.b16 %v619, %v615
    %v832 = vpack.c.b16 %v620, %v616
    %v833 = vpack.c.b16 %v625, %v621
    %v834 = vpack.c.b16 %v626, %v622
    %v835 = vpack.c.b16 %v627, %v623
    %v836 = vpack.c.b16 %v628, %v624
    %v837 = vpack.c.b16 %v633, %v629
    %v838 = vpack.c.b16 %v634, %v630
    %v839 = vpack.c.b16 %v635, %v631
    %v840 = vpack.c.b16 %v636, %v632
    %v841 = vpack.c.b16 %v641, %v637
    %v842 = vpack.c.b16 %v642, %v638
    %v843 = vpack.c.b16 %v643, %v639
    %v844 = vpack.c.b16 %v644, %v640
    %v845 = vpack.c.b16 %v649, %v645
    %v846 = vpack.c.b16 %v650, %v646
    %v847 = vpack.c.b16 %v651, %v647
    %v848 = vpack.c.b16 %v652, %v648
    %v849 = vpack.c.b16 %v657, %v653
    %v850 = vpack.c.b16 %v658, %v654
    %v851 = vpack.c.b16 %v659, %v655
    %v852 = vpack.c.b16 %v660, %v656
    %v853 = vpack.c.b16 %v665, %v661
    %v854 = vpack.c.b16 %v666, %v662
    %v855 = vpack.c.b16 %v667, %v663
    %v856 = vpack.c.b16 %v668, %v664
    %v857 = vpack.c.b16 %v673, %v669
    %v858 = vpack.c.b16 %v674, %v670
    %v859 = vpack.c.b16 %v675, %v671
    %v860 = vpack.c.b16 %v676, %v672
    %v861 = vpack.c.b16 %v681, %v677
    %v862 = vpack.c.b16 %v682, %v678
    %v863 = vpack.c.b16 %v683, %v679
    %v864 = vpack.c.b16 %v684, %v680
    %v865 = vpack.c.b16 %v689, %v685
    %v866 = vpack.c.b16 %v690, %v686
    %v867 = vpack.c.b16 %v691, %v687
    %v868 = vpack.c.b16 %v692, %v688
    %v869 = vpack.c.b16 %v697, %v693
    %v870 = vpack.c.b16 %v698, %v694
    %v871 = vpack.c.b16 %v699, %v695
    %v872 = vpack.c.b16 %v700, %v696
    %v873 = vpack.c.b16 %v705, %v701
    %v874 = vpack.c.b16 %v706, %v702
    %v875 = vpack.c.b16 %v707, %v703
    %v876 = vpack.c.b16 %v708, %v704
    %v877 = vpack.c.b16 %v713, %v709
    %v878 = vpack.c.b16 %v714, %v710
    %v879 = vpack.c.b16 %v715, %v711
    %v880 = vpack.c.b16 %v716, %v712
    %v881 = vpack.c.b16 %v721, %v717
    %v882 = vpack.c.b16 %v722, %v718
    %v883 = vpack.c.b16 %v723, %v719
    %v884 = vpack.c.b16 %v724, %v720
    %v885 = vpack.c.b16 %v729, %v725
    %v886 = vpack.c.b16 %v730, %v726
    %v887 = vpack.c.b16 %v731, %v727
    %v888 = vpack.c.b16 %v732, %v728
    %v889 = vpack.c.b16 %v737, %v733
    %v890 = vpack.c.b16 %v738, %v734
    %v891 = vpack.c.b16 %v739, %v735
    %v892 = vpack.c.b16 %v740, %v736
    %v893 = vpack.c.b16 %v745, %v741
    %v894 = vpack.c.b16 %v746, %v742
    %v895 = vpack.c.b16 %v747, %v743
    %v896 = vpack.c.b16 %v748, %v744
    %v897 = vpack.c.b16 %v753, %v749
    %v898 = vpack.c.b16 %v754, %v750
    %v899 = vpack.c.b16 %v755, %v751
    %v900 = vpack.c.b16 %v756, %v752
    %v901 = vpack.c.b16 %v761, %v757
    %v902 = vpack.c.b16 %v762, %v758
    %v903 = vpack.c.b16 %v763, %v759
    %v904 = vpack.c.b16 %v764, %v760
    %v905 = vpack.c.b16 %v769, %v765
    %v906 = vpack.c.b16 %v770, %v766
    %v907 = vpack.c.b16 %v771, %v767
    %v908 = vpack.c.b16 %v772, %v768
    %v909 = vpack.c.b16 %v777, %v773
    %v910 = vpack.c.b16 %v778, %v774
    %v911 = vpack.c.b16 %v779, %v775
    %v912 = vpack.c.b16 %v780, %v776
    %v913 = vpack.c.b16 %v785, %v781
    %v914 = vpack.c.b16 %v786, %v782
    %v915 = vpack.c.b16 %v787, %v783
    %v916 = vpack.c.b16 %v788, %v784
    %1045 = vmatpush.bf16.msra.mxu0 %v817
    %1046 = vmatpush.bf16.msra.mxu0 %v813
    %1047 = vmatpush.bf16.msra.mxu0 %v809
    %1048 = vmatpush.bf16.msra.mxu0 %v805
    %1049 = vmatpush.bf16.msra.mxu0 %v801
    %1050 = vmatpush.bf16.msra.mxu0 %v797
    %1051 = vmatpush.bf16.msra.mxu0 %v793
    %1052 = vmatpush.bf16.msra.mxu0 %v789
    %1053 = vmatmul.bf16.gmra.mxu0 %v263
    %v1054 = vpop.f32.mrf.mxu0
    %v1055 = vadd.f32 %v397, %v1054
    %v1056 = vpop.f32.mrf.mxu0
    %1057 = vdwg.mxu0
    %1058 = vmatpush.bf16.msra.mxu0 %v849
    %1059 = vmatpush.bf16.msra.mxu0 %v845
    %1060 = vmatpush.bf16.msra.mxu0 %v841
    %1061 = vmatpush.bf16.msra.mxu0 %v837
    %1062 = vmatpush.bf16.msra.mxu0 %v833
    %1063 = vmatpush.bf16.msra.mxu0 %v829
    %1064 = vmatpush.bf16.msra.mxu0 %v825
    %1065 = vmatpush.bf16.msra.mxu0 %v821
    %1066 = vmatmul.bf16.gmra.mxu0 %v264
    %v1067 = vpop.f32.mrf.mxu0
    %v1068 = vadd.f32 %v1055, %v1067
    %v1069 = vpop.f32.mrf.mxu0
    %1070 = vdwg.mxu0
    %1071 = vmatpush.bf16.msra.mxu0 %v881
    %1072 = vmatpush.bf16.msra.mxu0 %v877
    %1073 = vmatpush.bf16.msra.mxu0 %v873
    %1074 = vmatpush.bf16.msra.mxu0 %v869
    %1075 = vmatpush.bf16.msra.mxu0 %v865
    %1076 = vmatpush.bf16.msra.mxu0 %v861
    %1077 = vmatpush.bf16.msra.mxu0 %v857
    %1078 = vmatpush.bf16.msra.mxu0 %v853
    %1079 = vmatmul.bf16.gmra.mxu0 %v265
    %v1080 = vpop.f32.mrf.mxu0
    %v1081 = vadd.f32 %v1068, %v1080
    %v1082 = vpop.f32.mrf.mxu0
    %1083 = vdwg.mxu0
    %1084 = vmatpush.bf16.msra.mxu0 %v913
    %1085 = vmatpush.bf16.msra.mxu0 %v909
    %1086 = vmatpush.bf16.msra.mxu0 %v905
    %1087 = vmatpush.bf16.msra.mxu0 %v901
    %1088 = vmatpush.bf16.msra.mxu0 %v897
    %1089 = vmatpush.bf16.msra.mxu0 %v893
    %1090 = vmatpush.bf16.msra.mxu0 %v889
    %1091 = vmatpush.bf16.msra.mxu0 %v885
    %1092 = vmatmul.bf16.gmra.mxu0 %v266
    %v1093 = vpop.f32.mrf.mxu0
    %v1094 = vadd.f32 %v1081, %v1093
    %v1095 = vpop.f32.mrf.mxu0
    %1096 = vdwg.mxu0
    %1097 = vmatpush.bf16.msra.mxu0 %v818
    %1098 = vmatpush.bf16.msra.mxu0 %v814
    %1099 = vmatpush.bf16.msra.mxu0 %v810
    %1100 = vmatpush.bf16.msra.mxu0 %v806
    %1101 = vmatpush.bf16.msra.mxu0 %v802
    %1102 = vmatpush.bf16.msra.mxu0 %v798
    %1103 = vmatpush.bf16.msra.mxu0 %v794
    %1104 = vmatpush.bf16.msra.mxu0 %v790
    %1105 = vmatmul.bf16.gmra.mxu0 %v263
    %v1106 = vpop.f32.mrf.mxu0
    %v1107 = vadd.f32 %v398, %v1106
    %v1108 = vpop.f32.mrf.mxu0
    %1109 = vdwg.mxu0
    %1110 = vmatpush.bf16.msra.mxu0 %v850
    %1111 = vmatpush.bf16.msra.mxu0 %v846
    %1112 = vmatpush.bf16.msra.mxu0 %v842
    %1113 = vmatpush.bf16.msra.mxu0 %v838
    %1114 = vmatpush.bf16.msra.mxu0 %v834
    %1115 = vmatpush.bf16.msra.mxu0 %v830
    %1116 = vmatpush.bf16.msra.mxu0 %v826
    %1117 = vmatpush.bf16.msra.mxu0 %v822
    %1118 = vmatmul.bf16.gmra.mxu0 %v264
    %v1119 = vpop.f32.mrf.mxu0
    %v1120 = vadd.f32 %v1107, %v1119
    %v1121 = vpop.f32.mrf.mxu0
    %1122 = vdwg.mxu0
    %1123 = vmatpush.bf16.msra.mxu0 %v882
    %1124 = vmatpush.bf16.msra.mxu0 %v878
    %1125 = vmatpush.bf16.msra.mxu0 %v874
    %1126 = vmatpush.bf16.msra.mxu0 %v870
    %1127 = vmatpush.bf16.msra.mxu0 %v866
    %1128 = vmatpush.bf16.msra.mxu0 %v862
    %1129 = vmatpush.bf16.msra.mxu0 %v858
    %1130 = vmatpush.bf16.msra.mxu0 %v854
    %1131 = vmatmul.bf16.gmra.mxu0 %v265
    %v1132 = vpop.f32.mrf.mxu0
    %v1133 = vadd.f32 %v1120, %v1132
    %v1134 = vpop.f32.mrf.mxu0
    %1135 = vdwg.mxu0
    %1136 = vmatpush.bf16.msra.mxu0 %v914
    %1137 = vmatpush.bf16.msra.mxu0 %v910
    %1138 = vmatpush.bf16.msra.mxu0 %v906
    %1139 = vmatpush.bf16.msra.mxu0 %v902
    %1140 = vmatpush.bf16.msra.mxu0 %v898
    %1141 = vmatpush.bf16.msra.mxu0 %v894
    %1142 = vmatpush.bf16.msra.mxu0 %v890
    %1143 = vmatpush.bf16.msra.mxu0 %v886
    %1144 = vmatmul.bf16.gmra.mxu0 %v266
    %v1145 = vpop.f32.mrf.mxu0
    %v1146 = vadd.f32 %v1133, %v1145
    %v1147 = vpop.f32.mrf.mxu0
    %1148 = vdwg.mxu0
    %1149 = vmatpush.bf16.msra.mxu0 %v819
    %1150 = vmatpush.bf16.msra.mxu0 %v815
    %1151 = vmatpush.bf16.msra.mxu0 %v811
    %1152 = vmatpush.bf16.msra.mxu0 %v807
    %1153 = vmatpush.bf16.msra.mxu0 %v803
    %1154 = vmatpush.bf16.msra.mxu0 %v799
    %1155 = vmatpush.bf16.msra.mxu0 %v795
    %1156 = vmatpush.bf16.msra.mxu0 %v791
    %1157 = vmatmul.bf16.gmra.mxu0 %v263
    %v1158 = vpop.f32.mrf.mxu0
    %v1159 = vadd.f32 %v399, %v1158
    %v1160 = vpop.f32.mrf.mxu0
    %1161 = vdwg.mxu0
    %1162 = vmatpush.bf16.msra.mxu0 %v851
    %1163 = vmatpush.bf16.msra.mxu0 %v847
    %1164 = vmatpush.bf16.msra.mxu0 %v843
    %1165 = vmatpush.bf16.msra.mxu0 %v839
    %1166 = vmatpush.bf16.msra.mxu0 %v835
    %1167 = vmatpush.bf16.msra.mxu0 %v831
    %1168 = vmatpush.bf16.msra.mxu0 %v827
    %1169 = vmatpush.bf16.msra.mxu0 %v823
    %1170 = vmatmul.bf16.gmra.mxu0 %v264
    %v1171 = vpop.f32.mrf.mxu0
    %v1172 = vadd.f32 %v1159, %v1171
    %v1173 = vpop.f32.mrf.mxu0
    %1174 = vdwg.mxu0
    %1175 = vmatpush.bf16.msra.mxu0 %v883
    %1176 = vmatpush.bf16.msra.mxu0 %v879
    %1177 = vmatpush.bf16.msra.mxu0 %v875
    %1178 = vmatpush.bf16.msra.mxu0 %v871
    %1179 = vmatpush.bf16.msra.mxu0 %v867
    %1180 = vmatpush.bf16.msra.mxu0 %v863
    %1181 = vmatpush.bf16.msra.mxu0 %v859
    %1182 = vmatpush.bf16.msra.mxu0 %v855
    %1183 = vmatmul.bf16.gmra.mxu0 %v265
    %v1184 = vpop.f32.mrf.mxu0
    %v1185 = vadd.f32 %v1172, %v1184
    %v1186 = vpop.f32.mrf.mxu0
    %1187 = vdwg.mxu0
    %1188 = vmatpush.bf16.msra.mxu0 %v915
    %1189 = vmatpush.bf16.msra.mxu0 %v911
    %1190 = vmatpush.bf16.msra.mxu0 %v907
    %1191 = vmatpush.bf16.msra.mxu0 %v903
    %1192 = vmatpush.bf16.msra.mxu0 %v899
    %1193 = vmatpush.bf16.msra.mxu0 %v895
    %1194 = vmatpush.bf16.msra.mxu0 %v891
    %1195 = vmatpush.bf16.msra.mxu0 %v887
    %1196 = vmatmul.bf16.gmra.mxu0 %v266
    %v1197 = vpop.f32.mrf.mxu0
    %v1198 = vadd.f32 %v1185, %v1197
    %v1199 = vpop.f32.mrf.mxu0
    %1200 = vdwg.mxu0
    %1201 = vmatpush.bf16.msra.mxu0 %v820
    %1202 = vmatpush.bf16.msra.mxu0 %v816
    %1203 = vmatpush.bf16.msra.mxu0 %v812
    %1204 = vmatpush.bf16.msra.mxu0 %v808
    %1205 = vmatpush.bf16.msra.mxu0 %v804
    %1206 = vmatpush.bf16.msra.mxu0 %v800
    %1207 = vmatpush.bf16.msra.mxu0 %v796
    %1208 = vmatpush.bf16.msra.mxu0 %v792
    %1209 = vmatmul.bf16.gmra.mxu0 %v263
    %v1210 = vpop.f32.mrf.mxu0
    %v1211 = vadd.f32 %v400, %v1210
    %v1212 = vpop.f32.mrf.mxu0
    %1213 = vdwg.mxu0
    %1214 = vmatpush.bf16.msra.mxu0 %v852
    %1215 = vmatpush.bf16.msra.mxu0 %v848
    %1216 = vmatpush.bf16.msra.mxu0 %v844
    %1217 = vmatpush.bf16.msra.mxu0 %v840
    %1218 = vmatpush.bf16.msra.mxu0 %v836
    %1219 = vmatpush.bf16.msra.mxu0 %v832
    %1220 = vmatpush.bf16.msra.mxu0 %v828
    %1221 = vmatpush.bf16.msra.mxu0 %v824
    %1222 = vmatmul.bf16.gmra.mxu0 %v264
    %v1223 = vpop.f32.mrf.mxu0
    %v1224 = vadd.f32 %v1211, %v1223
    %v1225 = vpop.f32.mrf.mxu0
    %1226 = vdwg.mxu0
    %1227 = vmatpush.bf16.msra.mxu0 %v884
    %1228 = vmatpush.bf16.msra.mxu0 %v880
    %1229 = vmatpush.bf16.msra.mxu0 %v876
    %1230 = vmatpush.bf16.msra.mxu0 %v872
    %1231 = vmatpush.bf16.msra.mxu0 %v868
    %1232 = vmatpush.bf16.msra.mxu0 %v864
    %1233 = vmatpush.bf16.msra.mxu0 %v860
    %1234 = vmatpush.bf16.msra.mxu0 %v856
    %1235 = vmatmul.bf16.gmra.mxu0 %v265
    %v1236 = vpop.f32.mrf.mxu0
    %v1237 = vadd.f32 %v1224, %v1236
    %v1238 = vpop.f32.mrf.mxu0
    %1239 = vdwg.mxu0
    %1240 = vmatpush.bf16.msra.mxu0 %v916
    %1241 = vmatpush.bf16.msra.mxu0 %v912
    %1242 = vmatpush.bf16.msra.mxu0 %v908
    %1243 = vmatpush.bf16.msra.mxu0 %v904
    %1244 = vmatpush.bf16.msra.mxu0 %v900
    %1245 = vmatpush.bf16.msra.mxu0 %v896
    %1246 = vmatpush.bf16.msra.mxu0 %v892
    %1247 = vmatpush.bf16.msra.mxu0 %v888
    %1248 = vmatmul.bf16.gmra.mxu0 %v266
    %v1249 = vpop.f32.mrf.mxu0
    %v1250 = vadd.f32 %v1237, %v1249
    %v1251 = vpop.f32.mrf.mxu0
    %1252 = vdwg.mxu0
    %v1253 = vtanh.pop %v1094
    %v1254 = vtanh.pop %v1146
    %v1255 = vxor.u32 %v1198, 2147483648
    %v1256 = vxor.u32 %v1250, 2147483648
    %v1257 = vmul.f32 %v1255, 1.442695
    %v1258 = vpow.pop %v1257
    %v1259 = vmul.f32 %v1256, 1.442695
    %v1260 = vpow.pop %v1259
    %v1261 = vadd.f32 %v1258, 1.0
    %v1262 = vadd.f32 %v1260, 1.0
    %v1263 = vrcp.pop %v1261
    %v1264 = vmul.f32 %v1261, %v1263
    %v1265 = vsub.f32 1.0, %v1264
    %v1266 = vmul.f32 %v1263, %v1265
    %v1267 = vadd.f32 %v1263, %v1266
    %vm1268 = vweird.f32 %v1261
    %vm1269 = vweird.f32 %v1263
    %vm1270 = vmor %vm1268, %vm1269
    %v1271 = vsel %vm1270, %v1263, %v1267
    %v1272 = vand.u32 2147483647, %v1261
    %vm1273 = vcmp.eq.f32.partialorder %v1272, 8.507059e+37
    %v1274 = vand.u32 %v1261, 2147483648
    %v1275 = vor.u32 1.1754944e-38, %v1274
    %v1276 = vsel %vm1273, %v1275, %v1271
    %v1277 = vmul.f32 1.0, %v1276
    %v1278 = vrcp.pop %v1262
    %v1279 = vmul.f32 %v1262, %v1278
    %v1280 = vsub.f32 1.0, %v1279
    %v1281 = vmul.f32 %v1278, %v1280
    %v1282 = vadd.f32 %v1278, %v1281
    %vm1283 = vweird.f32 %v1262
    %vm1284 = vweird.f32 %v1278
    %vm1285 = vmor %vm1283, %vm1284
    %v1286 = vsel %vm1285, %v1278, %v1282
    %v1287 = vand.u32 2147483647, %v1262
    %vm1288 = vcmp.eq.f32.partialorder %v1287, 8.507059e+37
    %v1289 = vand.u32 %v1262, 2147483648
    %v1290 = vor.u32 1.1754944e-38, %v1289
    %v1291 = vsel %vm1288, %v1290, %v1286
    %v1292 = vmul.f32 1.0, %v1291
    %v1293 = vmul.f32 %v1253, %v1277
    %v1294 = vmul.f32 %v1254, %v1292
    %v1295 = vpack.c.bf16 %v1293, %v1293
    %v1296 = vpack.c.bf16 %v1294, %v1294
    %v1297 = vld [vmem:[%s5] sm:$0xf]
    %v1298 = vld [vmem:[%s5 + $0x4] sm:$0xf]
    %v1299 = vld [vmem:[%s5 + $0x8] sm:$0xf]
    %v1300 = vld [vmem:[%s5 + $0xc] sm:$0xf]
    %v1301 = vld [vmem:[%s5 + $0x10] sm:$0xf]
    %v1302 = vld [vmem:[%s5 + $0x14] sm:$0xf]
    %v1303 = vld [vmem:[%s5 + $0x18] sm:$0xf]
    %v1304 = vld [vmem:[%s5 + $0x1c] sm:$0xf]
    %v1305 = vld [vmem:[%s5 + $0x20] sm:$0xf]
    %v1306 = vld [vmem:[%s5 + $0x24] sm:$0xf]
    %v1307 = vld [vmem:[%s5 + $0x28] sm:$0xf]
    %v1308 = vld [vmem:[%s5 + $0x2c] sm:$0xf]
    %v1309 = vld [vmem:[%s5 + $0x30] sm:$0xf]
    %v1310 = vld [vmem:[%s5 + $0x34] sm:$0xf]
    %v1311 = vld [vmem:[%s5 + $0x38] sm:$0xf]
    %v1312 = vld [vmem:[%s5 + $0x3c] sm:$0xf]
    %v1313 = vld [vmem:[%s5 + $0x40] sm:$0xf]
    %v1314 = vld [vmem:[%s5 + $0x44] sm:$0xf]
    %v1315 = vld [vmem:[%s5 + $0x48] sm:$0xf]
    %v1316 = vld [vmem:[%s5 + $0x4c] sm:$0xf]
    %v1317 = vld [vmem:[%s5 + $0x50] sm:$0xf]
    %v1318 = vld [vmem:[%s5 + $0x54] sm:$0xf]
    %v1319 = vld [vmem:[%s5 + $0x58] sm:$0xf]
    %v1320 = vld [vmem:[%s5 + $0x5c] sm:$0xf]
    %v1321 = vld [vmem:[%s5 + $0x60] sm:$0xf]
    %v1322 = vld [vmem:[%s5 + $0x64] sm:$0xf]
    %v1323 = vld [vmem:[%s5 + $0x68] sm:$0xf]
    %v1324 = vld [vmem:[%s5 + $0x6c] sm:$0xf]
    %v1325 = vld [vmem:[%s5 + $0x70] sm:$0xf]
    %v1326 = vld [vmem:[%s5 + $0x74] sm:$0xf]
    %v1327 = vld [vmem:[%s5 + $0x78] sm:$0xf]
    %v1328 = vld [vmem:[%s5 + $0x7c] sm:$0xf]
    %v1329 = vld [vmem:[%s6] sm:$0xff]
    %1331 = vset.pattern.permute.xlu0 0
    %1332 = vperm.xlu0 %1331, %v1329
    %v1333 = vpop.permute.xlu0 %1332
    %v1367 = vunpack.c.l.b16 %v1297
    %v1368 = vunpack.c.l.b16 %v1298
    %v1369 = vunpack.c.l.b16 %v1299
    %v1370 = vunpack.c.l.b16 %v1300
    %v1371 = vunpack.c.l.b16 %v1301
    %v1372 = vunpack.c.l.b16 %v1302
    %v1373 = vunpack.c.l.b16 %v1303
    %v1374 = vunpack.c.l.b16 %v1304
    %v1375 = vunpack.c.l.b16 %v1305
    %v1376 = vunpack.c.l.b16 %v1306
    %v1377 = vunpack.c.l.b16 %v1307
    %v1378 = vunpack.c.l.b16 %v1308
    %v1379 = vunpack.c.l.b16 %v1309
    %v1380 = vunpack.c.l.b16 %v1310
    %v1381 = vunpack.c.l.b16 %v1311
    %v1382 = vunpack.c.l.b16 %v1312
    %v1383 = vunpack.c.l.b16 %v1313
    %v1384 = vunpack.c.l.b16 %v1314
    %v1385 = vunpack.c.l.b16 %v1315
    %v1386 = vunpack.c.l.b16 %v1316
    %v1387 = vunpack.c.l.b16 %v1317
    %v1388 = vunpack.c.l.b16 %v1318
    %v1389 = vunpack.c.l.b16 %v1319
    %v1390 = vunpack.c.l.b16 %v1320
    %v1391 = vunpack.c.l.b16 %v1321
    %v1392 = vunpack.c.l.b16 %v1322
    %v1393 = vunpack.c.l.b16 %v1323
    %v1394 = vunpack.c.l.b16 %v1324
    %v1395 = vunpack.c.l.b16 %v1325
    %v1396 = vunpack.c.l.b16 %v1326
    %v1397 = vunpack.c.l.b16 %v1327
    %v1398 = vunpack.c.l.b16 %v1328
    %v1399 = vpack.c.b16 %v1368, %v1367
    %v1400 = vpack.c.b16 %v1370, %v1369
    %v1401 = vpack.c.b16 %v1372, %v1371
    %v1402 = vpack.c.b16 %v1374, %v1373
    %v1403 = vpack.c.b16 %v1376, %v1375
    %v1404 = vpack.c.b16 %v1378, %v1377
    %v1405 = vpack.c.b16 %v1380, %v1379
    %v1406 = vpack.c.b16 %v1382, %v1381
    %v1407 = vpack.c.b16 %v1384, %v1383
    %v1408 = vpack.c.b16 %v1386, %v1385
    %v1409 = vpack.c.b16 %v1388, %v1387
    %v1410 = vpack.c.b16 %v1390, %v1389
    %v1411 = vpack.c.b16 %v1392, %v1391
    %v1412 = vpack.c.b16 %v1394, %v1393
    %v1413 = vpack.c.b16 %v1396, %v1395
    %v1414 = vpack.c.b16 %v1398, %v1397
    %1431 = vxpose.xlu0.c.b16.start [1/8] %v1399, 128
    %1432 = vxpose.xlu0.c.b16.cont [2/8] %v1400, 128
    %1433 = vxpose.xlu0.c.b16.cont [3/8] %v1401, 128
    %1434 = vxpose.xlu0.c.b16.cont [4/8] %v1402, 128
    %1435 = vxpose.xlu0.c.b16.cont [5/8] %v1403, 128
    %1436 = vxpose.xlu0.c.b16.cont [6/8] %v1404, 128
    %1437 = vxpose.xlu0.c.b16.cont [7/8] %v1405, 128
    %1438 = vxpose.xlu0.c.b16.end [8/8] %v1406, 128
    %v1439 = vpop.trf.xlu0
    %v1440 = vpop.trf.xlu0
    %v1441 = vpop.trf.xlu0
    %v1442 = vpop.trf.xlu0
    %v1443 = vpop.trf.xlu0
    %v1444 = vpop.trf.xlu0
    %v1445 = vpop.trf.xlu0
    %v1446 = vpop.trf.xlu0
    %1447 = vxpose.xlu0.c.b16.start [1/8] %v1407, 128
    %1448 = vxpose.xlu0.c.b16.cont [2/8] %v1408, 128
    %1449 = vxpose.xlu0.c.b16.cont [3/8] %v1409, 128
    %1450 = vxpose.xlu0.c.b16.cont [4/8] %v1410, 128
    %1451 = vxpose.xlu0.c.b16.cont [5/8] %v1411, 128
    %1452 = vxpose.xlu0.c.b16.cont [6/8] %v1412, 128
    %1453 = vxpose.xlu0.c.b16.cont [7/8] %v1413, 128
    %1454 = vxpose.xlu0.c.b16.end [8/8] %v1414, 128
    %v1455 = vpop.trf.xlu0
    %v1456 = vpop.trf.xlu0
    %v1457 = vpop.trf.xlu0
    %v1458 = vpop.trf.xlu0
    %v1459 = vpop.trf.xlu0
    %v1460 = vpop.trf.xlu0
    %v1461 = vpop.trf.xlu0
    %v1462 = vpop.trf.xlu0
    %1463 = vmatpush.bf16.xpose.msra.mxu0 0
    %1464 = vmatpush.bf16.xpose.msra.mxu0 0
    %1465 = vmatpush.bf16.xpose.msra.mxu0 0
    %1466 = vmatpush.bf16.xpose.msra.mxu0 0
    %1467 = vmatpush.bf16.xpose.msra.mxu0 0
    %1468 = vmatpush.bf16.xpose.msra.mxu0 0
    %1469 = vmatpush.bf16.xpose.msra.mxu0 0
    %1470 = vmatpush.bf16.xpose.msra.mxu0 %v1295
    %1471 = vmatmul.bf16.gmra.mxu0 %v1439
    %v1472 = vpop.f32.mrf.mxu0
    %v1473 = vadd.f32 %v1333, %v1472
    %v1474 = vpop.f32.mrf.mxu0
    %1475 = vdwg.mxu0
    %1476 = vmatpush.bf16.xpose.msra.mxu0 0
    %1477 = vmatpush.bf16.xpose.msra.mxu0 0
    %1478 = vmatpush.bf16.xpose.msra.mxu0 0
    %1479 = vmatpush.bf16.xpose.msra.mxu0 0
    %1480 = vmatpush.bf16.xpose.msra.mxu0 0
    %1481 = vmatpush.bf16.xpose.msra.mxu0 0
    %1482 = vmatpush.bf16.xpose.msra.mxu0 0
    %1483 = vmatpush.bf16.xpose.msra.mxu0 %v1296
    %1484 = vmatmul.bf16.gmra.mxu0 %v1455
    %v1485 = vpop.f32.mrf.mxu0
    %v1486 = vadd.f32 %v1473, %v1485
    %v1487 = vpop.f32.mrf.mxu0
    %1488 = vdwg.mxu0
    %vm1489 = vcmask 64512
    %1490 = vst.msk [vmem:[#allocation12] sm:$0xff] %vm1489, %v1486
    %v1491 = vsel %vm1489, %v1486, -inf
    %1492 = vmax.xlane.f32.xlu0 %v1491
    %v1493 = vpop.xlane.xlu0 %1492
    %v1494 = vld [vmem:[#allocation2] sm:$0xff]
    %v1495 = vmax.f32 %v1494, %v1493
    %v1496 = vsub.f32 %v1494, %v1495
    %v1497 = vmul.f32 %v1496, 1.442695
    %v1498 = vpow.pop %v1497
    %1500 = vset.pattern.permute.xlu0 0
    %1501 = vperm.xlu0 %1500, %v1495
    %v1502 = vpop.permute.xlu0 %1501
    %v1504 = vsub.f32 %v1486, %v1502
    %v1505 = vmul.f32 %v1504, 1.442695
    %v1506 = vpow.pop %v1505
    %v1507 = vld [vmem:[#allocation3] sm:$0xff]
    %v1508 = vmul.f32 %v1498, %v1507
    %v1509 = vsel %vm1489, %v1506, 0.0
    %1510 = vadd.xlane.f32.xlu0 %v1509
    %v1511 = vpop.xlane.xlu0 %1510
    %v1512 = vadd.f32 %v1508, %v1511
    %vm1513 = vcmask 7168
    %1514 = vst.msk [vmem:[#allocation3] sm:$0xff] %vm1513, %v1512
    %v1515 = vpack.c.bf16 %v1506, %v1506
    %v1517 = vsel %vm1489, %v1515, 0
    %vm1519 = vcmask 1043456
    %v1521 = vsel %vm1519, %v263, 0
    %v1524 = vsel %vm1519, %v264, 0
    %v1527 = vsel %vm1519, %v265, 0
    %v1530 = vsel %vm1519, %v266, 0
    %1532 = vmatpush.bf16.msra.mxu0 0
    %1533 = vmatpush.bf16.msra.mxu0 0
    %1534 = vmatpush.bf16.msra.mxu0 0
    %1535 = vmatpush.bf16.msra.mxu0 0
    %1536 = vmatpush.bf16.msra.mxu0 0
    %1537 = vmatpush.bf16.msra.mxu0 0
    %1538 = vmatpush.bf16.msra.mxu0 0
    %1539 = vmatpush.bf16.msra.mxu0 %v1521
    %1540 = vmatmul.bf16.gmra.mxu0 %v1517
    %v1541 = vpop.f32.mrf.mxu0
    %v1542 = vadd.f32 0.0, %v1541
    %v1543 = vpop.f32.mrf.mxu0
    %1544 = vdwg.mxu0
    %1545 = vmatpush.bf16.msra.mxu0 0
    %1546 = vmatpush.bf16.msra.mxu0 0
    %1547 = vmatpush.bf16.msra.mxu0 0
    %1548 = vmatpush.bf16.msra.mxu0 0
    %1549 = vmatpush.bf16.msra.mxu0 0
    %1550 = vmatpush.bf16.msra.mxu0 0
    %1551 = vmatpush.bf16.msra.mxu0 0
    %1552 = vmatpush.bf16.msra.mxu0 %v1524
    %1553 = vmatmul.bf16.gmra.mxu0 %v1517
    %v1554 = vpop.f32.mrf.mxu0
    %v1555 = vadd.f32 0.0, %v1554
    %v1556 = vpop.f32.mrf.mxu0
    %1557 = vdwg.mxu0
    %1558 = vmatpush.bf16.msra.mxu0 0
    %1559 = vmatpush.bf16.msra.mxu0 0
    %1560 = vmatpush.bf16.msra.mxu0 0
    %1561 = vmatpush.bf16.msra.mxu0 0
    %1562 = vmatpush.bf16.msra.mxu0 0
    %1563 = vmatpush.bf16.msra.mxu0 0
    %1564 = vmatpush.bf16.msra.mxu0 0
    %1565 = vmatpush.bf16.msra.mxu0 %v1527
    %1566 = vmatmul.bf16.gmra.mxu0 %v1517
    %v1567 = vpop.f32.mrf.mxu0
    %v1568 = vadd.f32 0.0, %v1567
    %v1569 = vpop.f32.mrf.mxu0
    %1570 = vdwg.mxu0
    %1571 = vmatpush.bf16.msra.mxu0 0
    %1572 = vmatpush.bf16.msra.mxu0 0
    %1573 = vmatpush.bf16.msra.mxu0 0
    %1574 = vmatpush.bf16.msra.mxu0 0
    %1575 = vmatpush.bf16.msra.mxu0 0
    %1576 = vmatpush.bf16.msra.mxu0 0
    %1577 = vmatpush.bf16.msra.mxu0 0
    %1578 = vmatpush.bf16.msra.mxu0 %v1530
    %1579 = vmatmul.bf16.gmra.mxu0 %v1517
    %v1580 = vpop.f32.mrf.mxu0
    %v1581 = vadd.f32 0.0, %v1580
    %v1582 = vpop.f32.mrf.mxu0
    %1583 = vdwg.mxu0
    %v1584 = vld [vmem:[#allocation4] sm:$0xff]
    %v1585 = vld [vmem:[#allocation4 + $0x8] sm:$0xff]
    %v1586 = vld [vmem:[#allocation4 + $0x10] sm:$0xff]
    %v1587 = vld [vmem:[#allocation4 + $0x18] sm:$0xff]
    %1589 = vset.pattern.permute.xlu0 0
    %1590 = vperm.xlu0 %1589, %v1498
    %v1591 = vpop.permute.xlu0 %1590
    %v1593 = vmul.f32 %v1591, %v1584
    %v1594 = vmul.f32 %v1591, %v1585
    %v1595 = vmul.f32 %v1591, %v1586
    %v1596 = vmul.f32 %v1591, %v1587
    %v1597 = vadd.f32 %v1593, %v1542
    %v1598 = vadd.f32 %v1594, %v1555
    %v1599 = vadd.f32 %v1595, %v1568
    %v1600 = vadd.f32 %v1596, %v1581
    %1601 = vst [vmem:[#allocation4] sm:$0xff] %v1597
    %1602 = vst [vmem:[#allocation4 + $0x8] sm:$0xff] %v1598
    %1603 = vst [vmem:[#allocation4 + $0x10] sm:$0xff] %v1599
    %1604 = vst [vmem:[#allocation4 + $0x18] sm:$0xff] %v1600
    %1605 = vst.msk [vmem:[#allocation2] sm:$0xff] %vm1513, %v1495
    // Predicated region
    $region54: #{tpu_custom_call.1} parent=1 // pred_check
      %p1606 = pneg %p84
    $region55: #{tpu_custom_call.1} parent=1 // pred_check_branch
      %1608 = sbr.rel (%p1606) target = $region57
    $region56: #{tpu_custom_call.1} parent=1 // pred_region
      %v1609 = vld [vmem:[#allocation4] sm:$0xff]
      %v1610 = vld [vmem:[#allocation4 + $0x8] sm:$0xff]
      %v1611 = vld [vmem:[#allocation4 + $0x10] sm:$0xff]
      %v1612 = vld [vmem:[#allocation4 + $0x18] sm:$0xff]
      %v1613 = vld [vmem:[#allocation3] sm:$0xff]
      %1615 = vset.pattern.permute.xlu0 0
      %1616 = vperm.xlu0 %1615, %v1613
      %v1617 = vpop.permute.xlu0 %1616
      %v1619 = vrcp.pop %v1617
      %v1620 = vmul.f32 %v1617, %v1619
      %v1621 = vsub.f32 1.0, %v1620
      %v1622 = vmul.f32 %v1619, %v1621
      %v1623 = vadd.f32 %v1619, %v1622
      %vm1624 = vweird.f32 %v1617
      %vm1625 = vweird.f32 %v1619
      %vm1626 = vmor %vm1624, %vm1625
      %v1627 = vsel %vm1626, %v1619, %v1623
      %v1628 = vand.u32 2147483647, %v1617
      %vm1629 = vcmp.eq.f32.partialorder %v1628, 8.507059e+37
      %v1630 = vand.u32 %v1617, 2147483648
      %v1631 = vor.u32 1.1754944e-38, %v1630
      %v1632 = vsel %vm1629, %v1631, %v1627
      %v1633 = vmul.f32 %v1609, %v1632
      %v1634 = vmul.f32 %v1610, %v1632
      %v1635 = vmul.f32 %v1611, %v1632
      %v1636 = vmul.f32 %v1612, %v1632
      %1637 = vst [vmem:[#allocation13] sm:$0xff] %v1633
      %1638 = vst [vmem:[#allocation13 + $0x8] sm:$0xff] %v1634
      %1639 = vst [vmem:[#allocation13 + $0x10] sm:$0xff] %v1635
      %1640 = vst [vmem:[#allocation13 + $0x18] sm:$0xff] %v1636
      %v1641 = vld [vmem:[#allocation11] sm:$0xf]
      %v1643 = vperm.slane %v1641, 0
      %v1644 = vperm.slane %v1641, 1
      %v1645 = vperm.slane %v1641, 2
      %v1646 = vperm.slane %v1641, 3
      %v1651 = vmul.f32 %v1633, %v1643
      %v1652 = vmul.f32 %v1634, %v1644
      %v1653 = vmul.f32 %v1635, %v1645
      %v1654 = vmul.f32 %v1636, %v1646
      %v1655 = vadd.f32 %v1651, %v1652
      %v1656 = vadd.f32 %v1655, %v1653
      %v1657 = vadd.f32 %v1656, %v1654
      %1658 = vadd.xlane.f32.xlu0 %v1657
      %v1659 = vpop.xlane.xlu0 %1658
      %v1660 = vld [vmem:[#allocation5] sm:$0x1]
      %v1662 = vperm.slane %v1660, 0
      %v1664 = vadd.f32 %v1659, %v1662
      %1665 = vst.msk [vmem:[%s10] sm:$0xff] %vm1513, %v1664
      %v1666 = vlaneseq
      %v1667 = vshrl.u32 %v1666, 7
      %vm1668 = vcmp.lt.s32.totalorder %v1667, 2
      %v1669 = vsel %vm1668, %v1664, -1e+30
      %v1670 = vsel %vm1513, %v1669, -inf
      %v1671 = vrot.slane %v1670, 4
      %v1672 = vmax.f32 %v1670, %v1671
      %v1673 = vrot.slane %v1672, 2
      %v1674 = vmax.f32 %v1672, %v1673
      %v1675 = vrot.slane %v1674, 1
      %v1676 = vmax.f32 %v1674, %v1675
      %v1677 = vsub.f32 %v1669, %v1676
      %v1678 = vmul.f32 %v1677, 1.442695
      %v1679 = vpow.pop %v1678
      %v1680 = vsel %vm1513, %v1679, 0.0
      %v1681 = vrot.slane %v1680, 4
      %v1682 = vadd.f32 %v1680, %v1681
      %v1683 = vrot.slane %v1682, 2
      %v1684 = vadd.f32 %v1682, %v1683
      %v1685 = vrot.slane %v1684, 1
      %v1686 = vadd.f32 %v1684, %v1685
      %v1687 = vrcp.pop %v1686
      %v1688 = vmul.f32 %v1686, %v1687
      %v1689 = vsub.f32 1.0, %v1688
      %v1690 = vmul.f32 %v1687, %v1689
      %v1691 = vadd.f32 %v1687, %v1690
      %vm1692 = vweird.f32 %v1686
      %vm1693 = vweird.f32 %v1687
      %vm1694 = vmor %vm1692, %vm1693
      %v1695 = vsel %vm1694, %v1687, %v1691
      %v1696 = vand.u32 2147483647, %v1686
      %vm1697 = vcmp.eq.f32.partialorder %v1696, 8.507059e+37
      %v1698 = vand.u32 %v1686, 2147483648
      %v1699 = vor.u32 1.1754944e-38, %v1698
      %v1700 = vsel %vm1697, %v1699, %v1695
      %v1701 = vmul.f32 %v1679, %v1700
      %1702 = vst.msk [vmem:[%s11] sm:$0xff] %vm1513, %v1701
    $region57: #{tpu_custom_call.1} parent=1 // pred_fallthru
      _
    // Predicated region
    $region58: #{tpu_custom_call.1} parent=1 // pred_check
      _
    $region59: #{tpu_custom_call.1} parent=1 // pred_check_branch
      %1704 = sbr.rel (0) target = $region61
    $region60: #{tpu_custom_call.1} parent=1 // pred_region
      %1706 = vsyncadd [#allocation8], 0
      %s1708 = sshll.u32 [#allocation12], 4
      %s1709 = int_to_ptr.vmem [resolvable:$true] %s1708
      %s1710 = sshll.u32 %s9, 4
      %s1711 = int_to_ptr.hbm [resolvable:$true] %s1710
      %1713 = dma.vmem_to_hbm [thread:$0]  %s1709, 128, %s1711, [#allocation8]
    $region61: #{tpu_custom_call.1} parent=1 // pred_fallthru
      _
    // Predicated region
    $region62: #{tpu_custom_call.1} parent=1 // pred_check
      _
    $region63: #{tpu_custom_call.1} parent=1 // pred_check_branch
      %1715 = sbr.rel (0) target = $region65
    $region64: #{tpu_custom_call.1} parent=1 // pred_region
      _
    $region65: #{tpu_custom_call.1} parent=1 // pred_fallthru
      _
    // Predicated region
    $region66: #{tpu_custom_call.1} parent=1 // pred_check
      _
    $region67: #{tpu_custom_call.1} parent=1 // pred_check_branch
      %1717 = sbr.rel (0) target = $region69
    $region68: #{tpu_custom_call.1} parent=1 // pred_region
      _
    $region69: #{tpu_custom_call.1} parent=1 // pred_fallthru
      _
    // Predicated region
    $region70: #{tpu_custom_call.1} parent=1 // pred_check
      _
    $region71: #{tpu_custom_call.1} parent=1 // pred_check_branch
      %1719 = sbr.rel (0) target = $region73
    $region72: #{tpu_custom_call.1} parent=1 // pred_region
      %1721 = vsyncadd [#allocation14], 0
      %s1723 = sshll.u32 [#allocation13], 4
      %s1724 = int_to_ptr.vmem [resolvable:$true] %s1723
      %s1725 = sshll.u32 %s12, 4
      %s1726 = int_to_ptr.hbm [resolvable:$true] %s1725
      %1728 = dma.vmem_to_hbm [thread:$0]  %s1724, 512, %s1726, [#allocation14]
    $region73: #{tpu_custom_call.1} parent=1 // pred_fallthru
      _
    // Predicated region
    $region74: #{tpu_custom_call.1} parent=1 // pred_check
      _
    $region75: #{tpu_custom_call.1} parent=1 // pred_check_branch
      %1730 = sbr.rel (0) target = $region77
    $region76: #{tpu_custom_call.1} parent=1 // pred_region
      %1732 = dma.done [#allocation8], 128
    $region77: #{tpu_custom_call.1} parent=1 // pred_fallthru
      _
    // Predicated region
    $region78: #{tpu_custom_call.1} parent=1 // pred_check
      _
    $region79: #{tpu_custom_call.1} parent=1 // pred_check_branch
      %1734 = sbr.rel (0) target = $region81
    $region80: #{tpu_custom_call.1} parent=1 // pred_region
      _
    $region81: #{tpu_custom_call.1} parent=1 // pred_fallthru
      _
    // Predicated region
    $region82: #{tpu_custom_call.1} parent=1 // pred_check
      _
    $region83: #{tpu_custom_call.1} parent=1 // pred_check_branch
      %1736 = sbr.rel (0) target = $region85
    $region84: #{tpu_custom_call.1} parent=1 // pred_region
      _
    $region85: #{tpu_custom_call.1} parent=1 // pred_fallthru
      _
    // Predicated region
    $region86: #{tpu_custom_call.1} parent=1 // pred_check
      _
    $region87: #{tpu_custom_call.1} parent=1 // pred_check_branch
      %1738 = sbr.rel (0) target = $region89
    $region88: #{tpu_custom_call.1} parent=1 // pred_region
      %1740 = dma.done [#allocation14], 512
    $region89: #{tpu_custom_call.1} parent=1 // pred_fallthru
      _
    %1741 = vsyncpa [#allocation7], 1
    %1742 = vsyncpa [#allocation10], 1
    %1743 = vsyncpa [#allocation8], 1
    %1744 = vsyncpa [#allocation14], 1

</llo_original>
